<compile_context>
chip_gen: v6e
topology: v6e:2x2x1
jax: 0.10.0
libtpu: 0.0.40
codegen_flags: <defaults>
</compile_context>

<pallas_src>
import functools
import math

import jax
import jax.numpy as jnp
from jax import lax
from jax.experimental import pallas as pl
from jax.experimental.pallas import tpu as pltpu

N_EMBD = 200          # matches `n_embd` in the PyTorch module
BLOCK_SIZE = 128      # matches `block_size` (causal mask extent); T <= BLOCK_SIZE


# ----------------------------------------------------------------------------
# Kernel
# ----------------------------------------------------------------------------
def _mha_kernel(x_ref, wqkv_ref, wo_ref, bo_ref, o_ref, *, num_heads, head_pad):
    """One grid step = one block of B_blk batch elements.

    x_ref    : (B_blk, T, Cp)          VMEM  (Cp = n_embd padded to mult. of 128)
    wqkv_ref : (Cp, 3*num_heads*Hp)    VMEM  cols = [Q_all | K_all | V_all], Q pre-scaled
    wo_ref   : (num_heads*Hp, Cp)      VMEM  output projection (pre-transposed, zero-padded)
    bo_ref   : (1, Cp)                 VMEM  output projection bias (zero-padded)
    o_ref    : (B_blk, T, Cp)          VMEM  lane-dense (Cp multiple of 128) store
    """
    Bb, T, Cp = x_ref.shape
    Dp = num_heads * head_pad
    dt = x_ref.dtype                       # MXU feed dtype (bf16 fast path when bf16 in)

    x2 = x_ref[...].reshape(Bb * T, Cp)

    # Fused QKV projection: one wide, MXU-aligned GEMM (K = Cp, N = 3*Dp).
    qkv = jnp.dot(x2, wqkv_ref[...], preferred_element_type=jnp.float32)
    qkv = qkv.astype(dt)                   # downstream matmuls run at input precision

    def split_heads(t):                    # (Bb*T, Dp) -> (Bb*nh, T, Hp)
        t = t.reshape(Bb, T, num_heads, head_pad)
        return jnp.swapaxes(t, 1, 2).reshape(Bb * num_heads, T, head_pad)

    q = split_heads(qkv[:, :Dp])           # scale already folded into Q weights
    k = split_heads(qkv[:, Dp:2 * Dp])
    v = split_heads(qkv[:, 2 * Dp:])

    # Causal additive bias, built once per grid step (finite large-negative).
    row = lax.broadcasted_iota(jnp.int32, (T, T), 0)
    col = lax.broadcasted_iota(jnp.int32, (T, T), 1)
    causal_bias = jnp.where(col <= row, 0.0, -1e30).astype(jnp.float32)

    # All heads at once: single batched score matmul + single batched PV matmul.
    wei = jnp.einsum('bqd,bkd->bqk', q, k,
                     preferred_element_type=jnp.float32)        # (Bb*nh, T, T) f32
    wei = wei + causal_bias[None, :, :]

    # Numerically stable softmax along keys (elementwise math kept in f32).
    m = jnp.max(wei, axis=-1, keepdims=True)
    p = jnp.exp(wei - m)
    denom = jnp.sum(p, axis=-1, keepdims=True)
    probs = p * pl.reciprocal(denom, approx=True)

    # dropout(p=0.0) on the attention weights is identity — skipped.
    pv = jnp.einsum('bqk,bkd->bqd', probs.astype(dt), v,
                    preferred_element_type=jnp.float32)          # (Bb*nh, T, Hp)

    att = jnp.swapaxes(pv.reshape(Bb, num_heads, T, head_pad), 1, 2)
    att = att.reshape(Bb * T, Dp).astype(dt)

    # Fused output projection (+ bias); lane-dense Cp-wide store.
    y = jnp.dot(att, wo_ref[...], preferred_element_type=jnp.float32) + bo_ref[...]
    o_ref[...] = y.reshape(Bb, T, Cp).astype(o_ref.dtype)


# ----------------------------------------------------------------------------
# Wrapper helpers
# ----------------------------------------------------------------------------
def _round_up(x, m):
    return (x + m - 1) // m * m


def _device_info():
    """(num_tensorcores, vmem_limit_bytes, max_block_rows) per TPU generation."""
    try:
        kind = jax.devices()[0].device_kind.lower()
    except Exception:  # pragma: no cover - defensive
        kind = ""
    is_v7 = "v7" in kind
    if is_v7:
        # 2 TCs/chip, 64 MiB physical VMEM -> conservative scoped limit & block size.
        return 2, 32 * 1024 * 1024, 2048
    # v5e / v6e: 1 TC, 128 MiB physical VMEM -> raise the scoped limit, bigger blocks.
    return 1, 64 * 1024 * 1024, 4096


def _pick_b_blk(batch, seq_len, *, num_cores=1, target_rows=512, max_rows=4096):
    """Pick a batch block so each grid step feeds ~target_rows GEMM rows to the MXU,
    capped by a VMEM-derived max; on multi-TC parts prefer grids that split evenly."""
    divisors = [d for d in range(1, batch + 1) if batch % d == 0]
    fitting = [d for d in divisors if d * seq_len <= max_rows] or [1]
    hitting = [d for d in fitting if d * seq_len >= target_rows]
    # Smallest block that reaches the target (keeps the grid as long as possible),
    # otherwise the largest block that fits (single-TC parts don't need grid >= 2).
    cand = min(hitting) if hitting else max(fitting)
    if num_cores > 1:
        # Prefer an even split across TensorCores; accept at most a 2x smaller block.
        even = [d for d in fitting
                if (batch // d) % num_cores == 0
                and 2 * d * seq_len >= min(target_rows, cand * seq_len)]
        if even:
            even_hit = [d for d in even if d * seq_len >= target_rows]
            cand = min(even_hit) if even_hit else max(even)
    return cand


def pack_qkv_weights(w_queries, w_keys, w_values, *, head_pad, c_pad, scale):
    """Per-head (C, H) weight lists -> one (Cp, 3*nh*Hp) slab, layout [Q_all|K_all|V_all].
    Q columns are pre-scaled by head_size**-0.5; H->Hp and C->Cp are zero-padded."""
    def pad(w, s=1.0):
        c, h = w.shape
        return jnp.pad(w * s, ((0, c_pad - c), (0, head_pad - h)))
    wq = jnp.concatenate([pad(w, scale) for w in w_queries], axis=1)
    wk = jnp.concatenate([pad(w) for w in w_keys], axis=1)
    wv = jnp.concatenate([pad(w) for w in w_values], axis=1)
    return jnp.concatenate([wq, wk, wv], axis=1)


def pack_out_weights(w_out, b_out, *, num_heads, head_size, head_pad, c_pad):
    """(nh*H, C) projection -> (nh*Hp, Cp) with zero rows at padded head slots;
    bias -> (1, Cp) zero-padded."""
    d, c = w_out.shape
    assert d == num_heads * head_size
    w = w_out.reshape(num_heads, head_size, c)
    w = jnp.pad(w, ((0, 0), (0, head_pad - head_size), (0, c_pad - c)))
    b = jnp.pad(b_out, (0, c_pad - c)).reshape(1, c_pad)
    return w.reshape(num_heads * head_pad, c_pad), b


# ----------------------------------------------------------------------------
# Public forward
# ----------------------------------------------------------------------------
def multi_head_attention_forward(x, w_queries, w_keys, w_values, w_out, b_out, *,
                                 num_heads, head_size, b_blk=None):
    """x: (B, T, C). Per-head weights stored pre-transposed as (C, head_size);
    w_out pre-transposed as (num_heads*head_size, C); b_out (C,). Returns (B, T, C)."""
    B, T, C = x.shape
    assert C == N_EMBD and T <= BLOCK_SIZE
    assert len(w_queries) == len(w_keys) == len(w_values) == num_heads
    assert w_out.shape == (num_heads * head_size, C)
    assert b_out.shape == (C,)

    num_cores, vmem_limit, max_rows = _device_info()

    # Padded, MXU / vreg-aligned sizes.
    c_pad = _round_up(C, 128)            # 200 -> 256: lane-dense stores, aligned GEMMs
    head_pad = _round_up(head_size, 64)  # 50  -> 64 : clean per-head splits
    d_pad = num_heads * head_pad

    scale = head_size ** -0.5            # folded into the Q weight columns
    w_qkv = pack_qkv_weights(w_queries, w_keys, w_values,
                             head_pad=head_pad, c_pad=c_pad, scale=scale)
    w_o, b_o = pack_out_weights(w_out, b_out, num_heads=num_heads,
                                head_size=head_size, head_pad=head_pad, c_pad=c_pad)

    x_p = jnp.pad(x, ((0, 0), (0, 0), (0, c_pad - C)))

    if b_blk is None:
        b_blk = _pick_b_blk(B, T, num_cores=num_cores, max_rows=max_rows)
    assert B % b_blk == 0
    grid = (B // b_blk,)

    kernel = functools.partial(_mha_kernel, num_heads=num_heads, head_pad=head_pad)

    out = pl.pallas_call(
        kernel,
        out_shape=jax.ShapeDtypeStruct((B, T, c_pad), x.dtype),
        grid_spec=pltpu.PrefetchScalarGridSpec(
            num_scalar_prefetch=0,
            grid=grid,
            in_specs=[
                pl.BlockSpec((b_blk, T, c_pad), lambda b: (b, 0, 0)),
                pl.BlockSpec((c_pad, 3 * d_pad), lambda b: (0, 0)),
                pl.BlockSpec((d_pad, c_pad), lambda b: (0, 0)),
                pl.BlockSpec((1, c_pad), lambda b: (0, 0)),
            ],
            out_specs=pl.BlockSpec((b_blk, T, c_pad), lambda b: (b, 0, 0)),
        ),
        compiler_params=pltpu.CompilerParams(
            dimension_semantics=("parallel",),
            vmem_limit_bytes=vmem_limit,
        ),
    )(x_p, w_qkv, w_o, b_o)

    return out[:, :, :C]                 # drop the zero channel padding


# ----------------------------------------------------------------------------
# Pure-JAX reference (matches the PyTorch forward exactly)
# ----------------------------------------------------------------------------
def _reference(x, w_queries, w_keys, w_values, w_out, b_out):
    T = x.shape[1]
    tril = jnp.tril(jnp.ones((T, T), dtype=bool))
    outs = []
    for wq, wk, wv in zip(w_queries, w_keys, w_values):
        q = x @ wq
        k = x @ wk
        v = x @ wv
        wei = (q @ jnp.swapaxes(k, -2, -1)) * (k.shape[-1] ** -0.5)
        wei = jnp.where(tril, wei, -jnp.inf)
        wei = jax.nn.softmax(wei, axis=-1)
        outs.append(wei @ v)
    cat = jnp.concatenate(outs, axis=-1)
    return cat @ w_out + b_out


if __name__ == "__main__":
    key = jax.random.PRNGKey(0)
    B, T = 2, 8
    C = N_EMBD
    num_heads, head_size = 4, 50          # num_heads * head_size == n_embd (proj requires it)
    D = num_heads * head_size

    keys = jax.random.split(key, 3 * num_heads + 3)
    x = jax.random.normal(keys[0], (B, T, C), dtype=jnp.float32)

    def uni(k, shape, bnd):
        return jax.random.uniform(k, shape, minval=-bnd, maxval=bnd, dtype=jnp.float32)

    # nn.Linear(n_embd, head_size, bias=False) default init: U(-1/sqrt(n_embd), ...).
    # Weights stored pre-transposed as (C, H) so the kernel computes x @ W directly.
    bound = 1.0 / math.sqrt(C)
    w_queries = [uni(keys[1 + 3 * h + 0], (C, head_size), bound) for h in range(num_heads)]
    w_keys = [uni(keys[1 + 3 * h + 1], (C, head_size), bound) for h in range(num_heads)]
    w_values = [uni(keys[1 + 3 * h + 2], (C, head_size), bound) for h in range(num_heads)]

    # Output projection nn.Linear(n_embd, n_embd): weight pre-transposed to (D, C), bias (C,).
    pbound = 1.0 / math.sqrt(D)
    w_out = uni(keys[-2], (D, C), pbound)
    b_out = uni(keys[-1], (C,), pbound)

    out = multi_head_attention_forward(
        x, w_queries, w_keys, w_values, w_out, b_out,
        num_heads=num_heads, head_size=head_size)
    out = jax.block_until_ready(out)

    ref = _reference(x, w_queries, w_keys, w_values, w_out, b_out)
    assert out.shape == (B, T, C)
    assert jnp.allclose(out, ref, atol=2e-3, rtol=2e-3), "mismatch vs reference"

    print("KERNEL_OK")
</pallas_src>

<mosaic_0001>
module attributes {stable_mosaic.version = 11 : i64} {
  func.func @_mha_kernel(%arg0: i32, %arg1: memref<2x8x256xf32, #tpu.memory_space<vmem>>, %arg2: memref<256x768xf32, #tpu.memory_space<vmem>>, %arg3: memref<256x256xf32, #tpu.memory_space<vmem>>, %arg4: memref<1x256xf32, #tpu.memory_space<vmem>>, %arg5: memref<2x8x256xf32, #tpu.memory_space<vmem>>) attributes {dimension_semantics = [#tpu.dimension_semantics<parallel>], iteration_bounds = array<i64: 1>, scalar_prefetch = 0 : i64, scratch_operands = 0 : i64, tpu.core_type = #tpu.core_type<tc>, window_params = [{transform_indices = @transform_0, window_bounds = array<i64: 2, 8, 256>}, {pipeline_mode = #tpu.pipeline_mode<synchronous>, transform_indices = @transform_1, window_bounds = array<i64: 256, 768>}, {pipeline_mode = #tpu.pipeline_mode<synchronous>, transform_indices = @transform_2, window_bounds = array<i64: 256, 256>}, {pipeline_mode = #tpu.pipeline_mode<synchronous>, transform_indices = @transform_3, window_bounds = array<i64: 1, 256>}, {transform_indices = @transform_4, window_bounds = array<i64: 2, 8, 256>}]} {
    %c0 = arith.constant 0 : index
    %c0_0 = arith.constant 0 : index
    %c0_1 = arith.constant 0 : index
    %0 = vector.load %arg1[%c0, %c0_0, %c0_1] : memref<2x8x256xf32, #tpu.memory_space<vmem>>, vector<2x8x256xf32>
    %1 = vector.shape_cast %0 : vector<2x8x256xf32> to vector<16x256xf32>
    %c0_2 = arith.constant 0 : index
    %c0_3 = arith.constant 0 : index
    %2 = vector.load %arg2[%c0_2, %c0_3] : memref<256x768xf32, #tpu.memory_space<vmem>>, vector<256x768xf32>
    %cst = arith.constant dense<0.000000e+00> : vector<16x768xf32>
    %3 = tpu.matmul %1, %2, %cst {dimension_numbers = #tpu.dot_dimension_numbers<[1], [0], [0], [1], [0, 0, 1, 1], [], []>} : vector<16x256xf32>, vector<256x768xf32>, vector<16x768xf32> -> vector<16x768xf32>
    %4 = vector.extract_strided_slice %3 {offsets = [0, 0], sizes = [16, 256], strides = [1, 1]} : vector<16x768xf32> to vector<16x256xf32>
    %5 = vector.shape_cast %4 : vector<16x256xf32> to vector<2x8x4x64xf32>
    %6 = tpu.transpose %5, [0, 2, 1, 3] : vector<2x8x4x64xf32> -> vector<2x4x8x64xf32>
    %7 = vector.shape_cast %6 : vector<2x4x8x64xf32> to vector<8x8x64xf32>
    %8 = vector.extract_strided_slice %3 {offsets = [0, 256], sizes = [16, 256], strides = [1, 1]} : vector<16x768xf32> to vector<16x256xf32>
    %9 = vector.shape_cast %8 : vector<16x256xf32> to vector<2x8x4x64xf32>
    %10 = tpu.transpose %9, [0, 2, 1, 3] : vector<2x8x4x64xf32> -> vector<2x4x8x64xf32>
    %11 = vector.shape_cast %10 : vector<2x4x8x64xf32> to vector<8x8x64xf32>
    %12 = vector.extract_strided_slice %3 {offsets = [0, 512], sizes = [16, 256], strides = [1, 1]} : vector<16x768xf32> to vector<16x256xf32>
    %13 = vector.shape_cast %12 : vector<16x256xf32> to vector<2x8x4x64xf32>
    %14 = tpu.transpose %13, [0, 2, 1, 3] : vector<2x8x4x64xf32> -> vector<2x4x8x64xf32>
    %15 = vector.shape_cast %14 : vector<2x4x8x64xf32> to vector<8x8x64xf32>
    %16 = tpu.iota {dimensions = array<i32: 0>} : vector<8x8xi32>
    %17 = tpu.iota {dimensions = array<i32: 1>} : vector<8x8xi32>
    %18 = arith.cmpi sle, %17, %16 : vector<8x8xi32>
    %cst_4 = arith.constant 0.000000e+00 : f32
    %cst_5 = arith.constant -1.000000e+30 : f32
    %19 = vector.broadcast %cst_4 : f32 to vector<8x8xf32>
    %20 = vector.broadcast %cst_5 : f32 to vector<8x8xf32>
    %21 = arith.select %18, %19, %20 : vector<8x8xi1>, vector<8x8xf32>
    "tpu.trace_start"() <{level = 10 : i32, message = "bqd,bkd->bqk"}> : () -> ()
    %cst_6 = arith.constant dense<0.000000e+00> : vector<8x8x8xf32>
    %22 = tpu.matmul %7, %11, %cst_6 {dimension_numbers = #tpu.dot_dimension_numbers<[2], [2], [1], [1], [0, 0, 0, 1, 1, 1], [0], [0]>} : vector<8x8x64xf32>, vector<8x8x64xf32>, vector<8x8x8xf32> -> vector<8x8x8xf32>
    "tpu.trace_stop"() : () -> ()
    %23 = vector.shape_cast %21 : vector<8x8xf32> to vector<1x8x8xf32>
    %24 = vector.broadcast %23 : vector<1x8x8xf32> to vector<8x8x8xf32>
    %25 = arith.addf %22, %24 : vector<8x8x8xf32>
    %cst_7 = arith.constant dense<0xFF800000> : vector<8x8xf32>
    %26 = vector.multi_reduction <maximumf>, %25, %cst_7 [2] : vector<8x8x8xf32> to vector<8x8xf32>
    %27 = vector.shape_cast %26 : vector<8x8xf32> to vector<8x8x1xf32>
    %28 = vector.broadcast %27 : vector<8x8x1xf32> to vector<8x8x8xf32>
    %29 = arith.subf %25, %28 : vector<8x8x8xf32>
    %30 = math.exp %29 : vector<8x8x8xf32>
    %cst_8 = arith.constant dense<0.000000e+00> : vector<8x8xf32>
    %31 = vector.multi_reduction <add>, %30, %cst_8 [2] : vector<8x8x8xf32> to vector<8x8xf32>
    %32 = vector.shape_cast %31 : vector<8x8xf32> to vector<8x8x1xf32>
    %33 = tpu.reciprocal %32 {approx = true} : vector<8x8x1xf32> -> vector<8x8x1xf32>
    %34 = vector.broadcast %33 : vector<8x8x1xf32> to vector<8x8x8xf32>
    %35 = arith.mulf %30, %34 : vector<8x8x8xf32>
    "tpu.trace_start"() <{level = 10 : i32, message = "bqk,bkd->bqd"}> : () -> ()
    %cst_9 = arith.constant dense<0.000000e+00> : vector<8x8x64xf32>
    %36 = tpu.matmul %35, %15, %cst_9 {dimension_numbers = #tpu.dot_dimension_numbers<[2], [1], [1], [2], [0, 0, 0, 1, 1, 2], [0], [0]>} : vector<8x8x8xf32>, vector<8x8x64xf32>, vector<8x8x64xf32> -> vector<8x8x64xf32>
    "tpu.trace_stop"() : () -> ()
    %37 = vector.shape_cast %36 : vector<8x8x64xf32> to vector<2x4x8x64xf32>
    %38 = tpu.transpose %37, [0, 2, 1, 3] : vector<2x4x8x64xf32> -> vector<2x8x4x64xf32>
    %39 = vector.shape_cast %38 : vector<2x8x4x64xf32> to vector<16x256xf32>
    %c0_10 = arith.constant 0 : index
    %c0_11 = arith.constant 0 : index
    %40 = vector.load %arg3[%c0_10, %c0_11] : memref<256x256xf32, #tpu.memory_space<vmem>>, vector<256x256xf32>
    %cst_12 = arith.constant dense<0.000000e+00> : vector<16x256xf32>
    %41 = tpu.matmul %39, %40, %cst_12 {dimension_numbers = #tpu.dot_dimension_numbers<[1], [0], [0], [1], [0, 0, 1, 1], [], []>} : vector<16x256xf32>, vector<256x256xf32>, vector<16x256xf32> -> vector<16x256xf32>
    %c0_13 = arith.constant 0 : index
    %c0_14 = arith.constant 0 : index
    %42 = vector.load %arg4[%c0_13, %c0_14] : memref<1x256xf32, #tpu.memory_space<vmem>>, vector<1x256xf32>
    %43 = vector.broadcast %42 : vector<1x256xf32> to vector<16x256xf32>
    %44 = arith.addf %41, %43 : vector<16x256xf32>
    %45 = vector.shape_cast %44 : vector<16x256xf32> to vector<2x8x256xf32>
    %c0_15 = arith.constant 0 : index
    %c0_16 = arith.constant 0 : index
    %c0_17 = arith.constant 0 : index
    %46 = vector.load %arg5[%c0_15, %c0_16, %c0_17] : memref<2x8x256xf32, #tpu.memory_space<vmem>>, vector<2x8x256xf32>
    tpu.vector_store %arg5[%c0_15, %c0_16, %c0_17], %45 {strides = array<i32>} : memref<2x8x256xf32, #tpu.memory_space<vmem>>, vector<2x8x256xf32>,
    return
  }
  func.func @transform_0(%arg0: i32) -> (i32, i32, i32) {
    %c0_i32 = arith.constant 0 : i32
    %c0_i32_0 = arith.constant 0 : i32
    %c0_i32_1 = arith.constant 0 : i32
    return %arg0, %c0_i32, %c0_i32_0 : i32, i32, i32
  }
  func.func @transform_1(%arg0: i32) -> (i32, i32) {
    %c0_i32 = arith.constant 0 : i32
    %c0_i32_0 = arith.constant 0 : i32
    %c0_i32_1 = arith.constant 0 : i32
    return %c0_i32, %c0_i32_0 : i32, i32
  }
  func.func @transform_2(%arg0: i32) -> (i32, i32) {
    %c0_i32 = arith.constant 0 : i32
    %c0_i32_0 = arith.constant 0 : i32
    %c0_i32_1 = arith.constant 0 : i32
    return %c0_i32, %c0_i32_0 : i32, i32
  }
  func.func @transform_3(%arg0: i32) -> (i32, i32) {
    %c0_i32 = arith.constant 0 : i32
    %c0_i32_0 = arith.constant 0 : i32
    %c0_i32_1 = arith.constant 0 : i32
    return %c0_i32, %c0_i32_0 : i32, i32
  }
  func.func @transform_4(%arg0: i32) -> (i32, i32, i32) {
    %c0_i32 = arith.constant 0 : i32
    %c0_i32_0 = arith.constant 0 : i32
    %c0_i32_1 = arith.constant 0 : i32
    return %arg0, %c0_i32, %c0_i32_0 : i32, i32, i32
  }
}

</mosaic_0001>

<llo_original>
// kernel: tpu_custom_call.1
$region0: #{tpu_custom_call.1}
  #allocation0 [shape = 'u32[]', space=smem, size = 0x4, offset = 0x4, fixed_abs, tag = 'smem constant byte address 0x4 - core index']
  #allocation1 [shape = 'u32[144,128]{1,0:T(1,128)}', space=vmem, size = 0x12000, scoped, tag = 'internal scratch']
  %s0 = inlined_call_operand.hbm [shape: f32[2,8,256], index: 0, kind: input, shape index: {}]
  %s1 = inlined_call_operand.hbm [shape: f32[256,768], index: 1, kind: input, shape index: {}]
  %s2 = inlined_call_operand.hbm [shape: f32[256,256], index: 2, kind: input, shape index: {}]
  %s3 = inlined_call_operand.vmem [shape: f32[1,256], index: 3, kind: input, shape index: {}]
  %s4 = inlined_call_operand.hbm [shape: f32[2,8,256], index: 4, kind: output, shape index: {}]
  %s5 = sld [smem:[#allocation0]]
  $region38: #{tpu_custom_call.1} parent=0
    _
  %s7 = ssub.s32 1, %s5
  %s8 = scalar_select 0, %s7, %s5
  $region1: #{tpu_custom_call.1} parent=0
    #allocation2 [shape = 'u8[16384]{0}', space=vmem, size = 0x4000, scoped, tag = 'input window, operand 0, single buffered']
    #allocation3 [shape = 's32[1]{0}', space=sflag, size = 0x4, scoped, tag = 'scoped memory for tpu_custom_call.1']
    #allocation4 [shape = 's32[1]{0}', space=sflag, size = 0x4, scoped, tag = 'scoped memory for tpu_custom_call.1']
    #allocation5 [shape = 'u8[786432]{0}', space=vmem, size = 0xc0000, scoped, tag = 'input window, operand 1, single buffered']
    #allocation6 [shape = 's32[1]{0}', space=sflag, size = 0x4, scoped, tag = 'scoped memory for tpu_custom_call.1']
    #allocation7 [shape = 'u8[262144]{0}', space=vmem, size = 0x40000, scoped, tag = 'input window, operand 2, single buffered']
    #allocation8 [shape = 'u8[16384]{0}', space=vmem, size = 0x4000, scoped, tag = 'output window, operand 0, single buffered']
    %9 = vsyncpa [#allocation3], 0
    %10 = vsyncpa [#allocation6], 0
    %11 = vsyncpa [#allocation4], 0
    // Predicated region
    $region2: #{tpu_custom_call.1} parent=1 // pred_check
      _
    $region3: #{tpu_custom_call.1} parent=1 // pred_check_branch
      %13 = sbr.rel (0) target = $region5
    $region4: #{tpu_custom_call.1} parent=1 // pred_region
      %s15 = ssub.s32 512, 512
      %16 = vsyncadd [#allocation3], %s15
      %s17 = sshll.u32 [#allocation2], 4
      %s18 = int_to_ptr.vmem [resolvable:$true] %s17
      %23 = dma.hbm_to_vmem [thread:$0]  %s0, 512, %s18, [#allocation3], 256, 256, 16
    $region5: #{tpu_custom_call.1} parent=1 // pred_fallthru
      _
    // Predicated region
    $region6: #{tpu_custom_call.1} parent=1 // pred_check
      _
    $region7: #{tpu_custom_call.1} parent=1 // pred_check_branch
      %25 = sbr.rel (0) target = $region9
    $region8: #{tpu_custom_call.1} parent=1 // pred_region
      %s27 = ssub.s32 24576, 24576
      %28 = vsyncadd [#allocation6], %s27
      %s29 = sshll.u32 [#allocation5], 4
      %s30 = int_to_ptr.vmem [resolvable:$true] %s29
      %35 = dma.hbm_to_vmem [thread:$0]  %s1, 24576, %s30, [#allocation6], 768, 768, 48
    $region9: #{tpu_custom_call.1} parent=1 // pred_fallthru
      _
    // Predicated region
    $region10: #{tpu_custom_call.1} parent=1 // pred_check
      _
    $region11: #{tpu_custom_call.1} parent=1 // pred_check_branch
      %37 = sbr.rel (0) target = $region13
    $region12: #{tpu_custom_call.1} parent=1 // pred_region
      %s39 = ssub.s32 8192, 8192
      %40 = vsyncadd [#allocation6], %s39
      %s41 = sshll.u32 [#allocation7], 4
      %s42 = int_to_ptr.vmem [resolvable:$true] %s41
      %47 = dma.hbm_to_vmem [thread:$0]  %s2, 8192, %s42, [#allocation6], 256, 256, 16
    $region13: #{tpu_custom_call.1} parent=1 // pred_fallthru
      _
    // Predicated region
    $region14: #{tpu_custom_call.1} parent=1 // pred_check
      _
    $region15: #{tpu_custom_call.1} parent=1 // pred_check_branch
      %49 = sbr.rel (0) target = $region17
    $region16: #{tpu_custom_call.1} parent=1 // pred_region
      _
    $region17: #{tpu_custom_call.1} parent=1 // pred_fallthru
      _
    // Predicated region
    $region18: #{tpu_custom_call.1} parent=1 // pred_check
      _
    $region19: #{tpu_custom_call.1} parent=1 // pred_check_branch
      %51 = sbr.rel (0) target = $region21
    $region20: #{tpu_custom_call.1} parent=1 // pred_region
      %52 = dma.done [#allocation3], 512
    $region21: #{tpu_custom_call.1} parent=1 // pred_fallthru
      _
    // Predicated region
    $region22: #{tpu_custom_call.1} parent=1 // pred_check
      _
    $region23: #{tpu_custom_call.1} parent=1 // pred_check_branch
      %54 = sbr.rel (0) target = $region25
    $region24: #{tpu_custom_call.1} parent=1 // pred_region
      %55 = dma.done [#allocation6], 24576
    $region25: #{tpu_custom_call.1} parent=1 // pred_fallthru
      _
    // Predicated region
    $region26: #{tpu_custom_call.1} parent=1 // pred_check
      _
    $region27: #{tpu_custom_call.1} parent=1 // pred_check_branch
      %57 = sbr.rel (0) target = $region29
    $region28: #{tpu_custom_call.1} parent=1 // pred_region
      %58 = dma.done [#allocation6], 8192
    $region29: #{tpu_custom_call.1} parent=1 // pred_fallthru
      _
    %v59 = vld [vmem:[#allocation2] sm:$0xff]
    %v60 = vld [vmem:[#allocation2 + $0x8] sm:$0xff]
    %v61 = vld [vmem:[#allocation2 + $0x10] sm:$0xff]
    %v62 = vld [vmem:[#allocation2 + $0x18] sm:$0xff]
    %v63 = vld [vmem:[#allocation5] sm:$0xff]
    %v64 = vld [vmem:[#allocation5 + $0x8] sm:$0xff]
    %v65 = vld [vmem:[#allocation5 + $0x10] sm:$0xff]
    %v66 = vld [vmem:[#allocation5 + $0x18] sm:$0xff]
    %v67 = vld [vmem:[#allocation5 + $0x20] sm:$0xff]
    %v68 = vld [vmem:[#allocation5 + $0x28] sm:$0xff]
    %v69 = vld [vmem:[#allocation5 + $0x30] sm:$0xff]
    %v70 = vld [vmem:[#allocation5 + $0x38] sm:$0xff]
    %v71 = vld [vmem:[#allocation5 + $0x40] sm:$0xff]
    %v72 = vld [vmem:[#allocation5 + $0x48] sm:$0xff]
    %v73 = vld [vmem:[#allocation5 + $0x50] sm:$0xff]
    %v74 = vld [vmem:[#allocation5 + $0x58] sm:$0xff]
    %v75 = vld [vmem:[#allocation5 + $0x60] sm:$0xff]
    %v76 = vld [vmem:[#allocation5 + $0x68] sm:$0xff]
    %v77 = vld [vmem:[#allocation5 + $0x70] sm:$0xff]
    %v78 = vld [vmem:[#allocation5 + $0x78] sm:$0xff]
    %v79 = vld [vmem:[#allocation5 + $0x80] sm:$0xff]
    %v80 = vld [vmem:[#allocation5 + $0x88] sm:$0xff]
    %v81 = vld [vmem:[#allocation5 + $0x90] sm:$0xff]
    %v82 = vld [vmem:[#allocation5 + $0x98] sm:$0xff]
    %v83 = vld [vmem:[#allocation5 + $0xa0] sm:$0xff]
    %v84 = vld [vmem:[#allocation5 + $0xa8] sm:$0xff]
    %v85 = vld [vmem:[#allocation5 + $0xb0] sm:$0xff]
    %v86 = vld [vmem:[#allocation5 + $0xb8] sm:$0xff]
    %v87 = vld [vmem:[#allocation5 + $0xc0] sm:$0xff]
    %v88 = vld [vmem:[#allocation5 + $0xc8] sm:$0xff]
    %v89 = vld [vmem:[#allocation5 + $0xd0] sm:$0xff]
    %v90 = vld [vmem:[#allocation5 + $0xd8] sm:$0xff]
    %v91 = vld [vmem:[#allocation5 + $0xe0] sm:$0xff]
    %v92 = vld [vmem:[#allocation5 + $0xe8] sm:$0xff]
    %v93 = vld [vmem:[#allocation5 + $0xf0] sm:$0xff]
    %v94 = vld [vmem:[#allocation5 + $0xf8] sm:$0xff]
    %v95 = vld [vmem:[#allocation5 + $0x100] sm:$0xff]
    %v96 = vld [vmem:[#allocation5 + $0x108] sm:$0xff]
    %v97 = vld [vmem:[#allocation5 + $0x110] sm:$0xff]
    %v98 = vld [vmem:[#allocation5 + $0x118] sm:$0xff]
    %v99 = vld [vmem:[#allocation5 + $0x120] sm:$0xff]
    %v100 = vld [vmem:[#allocation5 + $0x128] sm:$0xff]
    %v101 = vld [vmem:[#allocation5 + $0x130] sm:$0xff]
    %v102 = vld [vmem:[#allocation5 + $0x138] sm:$0xff]
    %v103 = vld [vmem:[#allocation5 + $0x140] sm:$0xff]
    %v104 = vld [vmem:[#allocation5 + $0x148] sm:$0xff]
    %v105 = vld [vmem:[#allocation5 + $0x150] sm:$0xff]
    %v106 = vld [vmem:[#allocation5 + $0x158] sm:$0xff]
    %v107 = vld [vmem:[#allocation5 + $0x160] sm:$0xff]
    %v108 = vld [vmem:[#allocation5 + $0x168] sm:$0xff]
    %v109 = vld [vmem:[#allocation5 + $0x170] sm:$0xff]
    %v110 = vld [vmem:[#allocation5 + $0x178] sm:$0xff]
    %v111 = vld [vmem:[#allocation5 + $0x180] sm:$0xff]
    %v112 = vld [vmem:[#allocation5 + $0x188] sm:$0xff]
    %v113 = vld [vmem:[#allocation5 + $0x190] sm:$0xff]
    %v114 = vld [vmem:[#allocation5 + $0x198] sm:$0xff]
    %v115 = vld [vmem:[#allocation5 + $0x1a0] sm:$0xff]
    %v116 = vld [vmem:[#allocation5 + $0x1a8] sm:$0xff]
    %v117 = vld [vmem:[#allocation5 + $0x1b0] sm:$0xff]
    %v118 = vld [vmem:[#allocation5 + $0x1b8] sm:$0xff]
    %v119 = vld [vmem:[#allocation5 + $0x1c0] sm:$0xff]
    %v120 = vld [vmem:[#allocation5 + $0x1c8] sm:$0xff]
    %v121 = vld [vmem:[#allocation5 + $0x1d0] sm:$0xff]
    %v122 = vld [vmem:[#allocation5 + $0x1d8] sm:$0xff]
    %v123 = vld [vmem:[#allocation5 + $0x1e0] sm:$0xff]
    %v124 = vld [vmem:[#allocation5 + $0x1e8] sm:$0xff]
    %v125 = vld [vmem:[#allocation5 + $0x1f0] sm:$0xff]
    %v126 = vld [vmem:[#allocation5 + $0x1f8] sm:$0xff]
    %v127 = vld [vmem:[#allocation5 + $0x200] sm:$0xff]
    %v128 = vld [vmem:[#allocation5 + $0x208] sm:$0xff]
    %v129 = vld [vmem:[#allocation5 + $0x210] sm:$0xff]
    %v130 = vld [vmem:[#allocation5 + $0x218] sm:$0xff]
    %v131 = vld [vmem:[#allocation5 + $0x220] sm:$0xff]
    %v132 = vld [vmem:[#allocation5 + $0x228] sm:$0xff]
    %v133 = vld [vmem:[#allocation5 + $0x230] sm:$0xff]
    %v134 = vld [vmem:[#allocation5 + $0x238] sm:$0xff]
    %v135 = vld [vmem:[#allocation5 + $0x240] sm:$0xff]
    %v136 = vld [vmem:[#allocation5 + $0x248] sm:$0xff]
    %v137 = vld [vmem:[#allocation5 + $0x250] sm:$0xff]
    %v138 = vld [vmem:[#allocation5 + $0x258] sm:$0xff]
    %v139 = vld [vmem:[#allocation5 + $0x260] sm:$0xff]
    %v140 = vld [vmem:[#allocation5 + $0x268] sm:$0xff]
    %v141 = vld [vmem:[#allocation5 + $0x270] sm:$0xff]
    %v142 = vld [vmem:[#allocation5 + $0x278] sm:$0xff]
    %v143 = vld [vmem:[#allocation5 + $0x280] sm:$0xff]
    %v144 = vld [vmem:[#allocation5 + $0x288] sm:$0xff]
    %v145 = vld [vmem:[#allocation5 + $0x290] sm:$0xff]
    %v146 = vld [vmem:[#allocation5 + $0x298] sm:$0xff]
    %v147 = vld [vmem:[#allocation5 + $0x2a0] sm:$0xff]
    %v148 = vld [vmem:[#allocation5 + $0x2a8] sm:$0xff]
    %v149 = vld [vmem:[#allocation5 + $0x2b0] sm:$0xff]
    %v150 = vld [vmem:[#allocation5 + $0x2b8] sm:$0xff]
    %v151 = vld [vmem:[#allocation5 + $0x2c0] sm:$0xff]
    %v152 = vld [vmem:[#allocation5 + $0x2c8] sm:$0xff]
    %v153 = vld [vmem:[#allocation5 + $0x2d0] sm:$0xff]
    %v154 = vld [vmem:[#allocation5 + $0x2d8] sm:$0xff]
    %v155 = vld [vmem:[#allocation5 + $0x2e0] sm:$0xff]
    %v156 = vld [vmem:[#allocation5 + $0x2e8] sm:$0xff]
    %v157 = vld [vmem:[#allocation5 + $0x2f0] sm:$0xff]
    %v158 = vld [vmem:[#allocation5 + $0x2f8] sm:$0xff]
    %v159 = vld [vmem:[#allocation5 + $0x300] sm:$0xff]
    %v160 = vld [vmem:[#allocation5 + $0x308] sm:$0xff]
    %v161 = vld [vmem:[#allocation5 + $0x310] sm:$0xff]
    %v162 = vld [vmem:[#allocation5 + $0x318] sm:$0xff]
    %v163 = vld [vmem:[#allocation5 + $0x320] sm:$0xff]
    %v164 = vld [vmem:[#allocation5 + $0x328] sm:$0xff]
    %v165 = vld [vmem:[#allocation5 + $0x330] sm:$0xff]
    %v166 = vld [vmem:[#allocation5 + $0x338] sm:$0xff]
    %v167 = vld [vmem:[#allocation5 + $0x340] sm:$0xff]
    %v168 = vld [vmem:[#allocation5 + $0x348] sm:$0xff]
    %v169 = vld [vmem:[#allocation5 + $0x350] sm:$0xff]
    %v170 = vld [vmem:[#allocation5 + $0x358] sm:$0xff]
    %v171 = vld [vmem:[#allocation5 + $0x360] sm:$0xff]
    %v172 = vld [vmem:[#allocation5 + $0x368] sm:$0xff]
    %v173 = vld [vmem:[#allocation5 + $0x370] sm:$0xff]
    %v174 = vld [vmem:[#allocation5 + $0x378] sm:$0xff]
    %v175 = vld [vmem:[#allocation5 + $0x380] sm:$0xff]
    %v176 = vld [vmem:[#allocation5 + $0x388] sm:$0xff]
    %v177 = vld [vmem:[#allocation5 + $0x390] sm:$0xff]
    %v178 = vld [vmem:[#allocation5 + $0x398] sm:$0xff]
    %v179 = vld [vmem:[#allocation5 + $0x3a0] sm:$0xff]
    %v180 = vld [vmem:[#allocation5 + $0x3a8] sm:$0xff]
    %v181 = vld [vmem:[#allocation5 + $0x3b0] sm:$0xff]
    %v182 = vld [vmem:[#allocation5 + $0x3b8] sm:$0xff]
    %v183 = vld [vmem:[#allocation5 + $0x3c0] sm:$0xff]
    %v184 = vld [vmem:[#allocation5 + $0x3c8] sm:$0xff]
    %v185 = vld [vmem:[#allocation5 + $0x3d0] sm:$0xff]
    %v186 = vld [vmem:[#allocation5 + $0x3d8] sm:$0xff]
    %v187 = vld [vmem:[#allocation5 + $0x3e0] sm:$0xff]
    %v188 = vld [vmem:[#allocation5 + $0x3e8] sm:$0xff]
    %v189 = vld [vmem:[#allocation5 + $0x3f0] sm:$0xff]
    %v190 = vld [vmem:[#allocation5 + $0x3f8] sm:$0xff]
    %v191 = vld [vmem:[#allocation5 + $0x400] sm:$0xff]
    %v192 = vld [vmem:[#allocation5 + $0x408] sm:$0xff]
    %v193 = vld [vmem:[#allocation5 + $0x410] sm:$0xff]
    %v194 = vld [vmem:[#allocation5 + $0x418] sm:$0xff]
    %v195 = vld [vmem:[#allocation5 + $0x420] sm:$0xff]
    %v196 = vld [vmem:[#allocation5 + $0x428] sm:$0xff]
    %v197 = vld [vmem:[#allocation5 + $0x430] sm:$0xff]
    %v198 = vld [vmem:[#allocation5 + $0x438] sm:$0xff]
    %v199 = vld [vmem:[#allocation5 + $0x440] sm:$0xff]
    %v200 = vld [vmem:[#allocation5 + $0x448] sm:$0xff]
    %v201 = vld [vmem:[#allocation5 + $0x450] sm:$0xff]
    %v202 = vld [vmem:[#allocation5 + $0x458] sm:$0xff]
    %v203 = vld [vmem:[#allocation5 + $0x460] sm:$0xff]
    %v204 = vld [vmem:[#allocation5 + $0x468] sm:$0xff]
    %v205 = vld [vmem:[#allocation5 + $0x470] sm:$0xff]
    %v206 = vld [vmem:[#allocation5 + $0x478] sm:$0xff]
    %v207 = vld [vmem:[#allocation5 + $0x480] sm:$0xff]
    %v208 = vld [vmem:[#allocation5 + $0x488] sm:$0xff]
    %v209 = vld [vmem:[#allocation5 + $0x490] sm:$0xff]
    %v210 = vld [vmem:[#allocation5 + $0x498] sm:$0xff]
    %v211 = vld [vmem:[#allocation5 + $0x4a0] sm:$0xff]
    %v212 = vld [vmem:[#allocation5 + $0x4a8] sm:$0xff]
    %v213 = vld [vmem:[#allocation5 + $0x4b0] sm:$0xff]
    %v214 = vld [vmem:[#allocation5 + $0x4b8] sm:$0xff]
    %v215 = vld [vmem:[#allocation5 + $0x4c0] sm:$0xff]
    %v216 = vld [vmem:[#allocation5 + $0x4c8] sm:$0xff]
    %v217 = vld [vmem:[#allocation5 + $0x4d0] sm:$0xff]
    %v218 = vld [vmem:[#allocation5 + $0x4d8] sm:$0xff]
    %v219 = vld [vmem:[#allocation5 + $0x4e0] sm:$0xff]
    %v220 = vld [vmem:[#allocation5 + $0x4e8] sm:$0xff]
    %v221 = vld [vmem:[#allocation5 + $0x4f0] sm:$0xff]
    %v222 = vld [vmem:[#allocation5 + $0x4f8] sm:$0xff]
    %v223 = vld [vmem:[#allocation5 + $0x500] sm:$0xff]
    %v224 = vld [vmem:[#allocation5 + $0x508] sm:$0xff]
    %v225 = vld [vmem:[#allocation5 + $0x510] sm:$0xff]
    %v226 = vld [vmem:[#allocation5 + $0x518] sm:$0xff]
    %v227 = vld [vmem:[#allocation5 + $0x520] sm:$0xff]
    %v228 = vld [vmem:[#allocation5 + $0x528] sm:$0xff]
    %v229 = vld [vmem:[#allocation5 + $0x530] sm:$0xff]
    %v230 = vld [vmem:[#allocation5 + $0x538] sm:$0xff]
    %v231 = vld [vmem:[#allocation5 + $0x540] sm:$0xff]
    %v232 = vld [vmem:[#allocation5 + $0x548] sm:$0xff]
    %v233 = vld [vmem:[#allocation5 + $0x550] sm:$0xff]
    %v234 = vld [vmem:[#allocation5 + $0x558] sm:$0xff]
    %v235 = vld [vmem:[#allocation5 + $0x560] sm:$0xff]
    %v236 = vld [vmem:[#allocation5 + $0x568] sm:$0xff]
    %v237 = vld [vmem:[#allocation5 + $0x570] sm:$0xff]
    %v238 = vld [vmem:[#allocation5 + $0x578] sm:$0xff]
    %v239 = vld [vmem:[#allocation5 + $0x580] sm:$0xff]
    %v240 = vld [vmem:[#allocation5 + $0x588] sm:$0xff]
    %v241 = vld [vmem:[#allocation5 + $0x590] sm:$0xff]
    %v242 = vld [vmem:[#allocation5 + $0x598] sm:$0xff]
    %v243 = vld [vmem:[#allocation5 + $0x5a0] sm:$0xff]
    %v244 = vld [vmem:[#allocation5 + $0x5a8] sm:$0xff]
    %v245 = vld [vmem:[#allocation5 + $0x5b0] sm:$0xff]
    %v246 = vld [vmem:[#allocation5 + $0x5b8] sm:$0xff]
    %v247 = vld [vmem:[#allocation5 + $0x5c0] sm:$0xff]
    %v248 = vld [vmem:[#allocation5 + $0x5c8] sm:$0xff]
    %v249 = vld [vmem:[#allocation5 + $0x5d0] sm:$0xff]
    %v250 = vld [vmem:[#allocation5 + $0x5d8] sm:$0xff]
    %v251 = vld [vmem:[#allocation5 + $0x5e0] sm:$0xff]
    %v252 = vld [vmem:[#allocation5 + $0x5e8] sm:$0xff]
    %v253 = vld [vmem:[#allocation5 + $0x5f0] sm:$0xff]
    %v254 = vld [vmem:[#allocation5 + $0x5f8] sm:$0xff]
    %255 = vmatprep.subr.mxu0 %v154
    %256 = vmatpush1.msra.mxu0 %v153
    %257 = vmatprep.subr.mxu0 %v148
    %258 = vmatpush1.msra.mxu0 %v147
    %259 = vmatprep.subr.mxu0 %v142
    %260 = vmatpush1.msra.mxu0 %v141
    %261 = vmatprep.subr.mxu0 %v136
    %262 = vmatpush1.msra.mxu0 %v135
    %263 = vmatprep.subr.mxu0 %v130
    %264 = vmatpush1.msra.mxu0 %v129
    %265 = vmatprep.subr.mxu0 %v124
    %266 = vmatpush1.msra.mxu0 %v123
    %267 = vmatprep.subr.mxu0 %v118
    %268 = vmatpush1.msra.mxu0 %v117
    %269 = vmatprep.subr.mxu0 %v112
    %270 = vmatpush1.msra.mxu0 %v111
    %271 = vmatprep.subr.mxu0 %v106
    %272 = vmatpush1.msra.mxu0 %v105
    %273 = vmatprep.subr.mxu0 %v100
    %274 = vmatpush1.msra.mxu0 %v99
    %275 = vmatprep.subr.mxu0 %v94
    %276 = vmatpush1.msra.mxu0 %v93
    %277 = vmatprep.subr.mxu0 %v88
    %278 = vmatpush1.msra.mxu0 %v87
    %279 = vmatprep.subr.mxu0 %v82
    %280 = vmatpush1.msra.mxu0 %v81
    %281 = vmatprep.subr.mxu0 %v76
    %282 = vmatpush1.msra.mxu0 %v75
    %283 = vmatprep.subr.mxu0 %v70
    %284 = vmatpush1.msra.mxu0 %v69
    %285 = vmatprep.subr.mxu0 %v64
    %286 = vmatpush1.msra.mxu0 %v63
    %287 = vmatprep.subr.mxu0 %v250
    %288 = vmatpush2.msra.mxu0 %v249
    %289 = vmatprep.subr.mxu0 %v244
    %290 = vmatpush2.msra.mxu0 %v243
    %291 = vmatprep.subr.mxu0 %v238
    %292 = vmatpush2.msra.mxu0 %v237
    %293 = vmatprep.subr.mxu0 %v232
    %294 = vmatpush2.msra.mxu0 %v231
    %295 = vmatprep.subr.mxu0 %v226
    %296 = vmatpush2.msra.mxu0 %v225
    %297 = vmatprep.subr.mxu0 %v220
    %298 = vmatpush2.msra.mxu0 %v219
    %299 = vmatprep.subr.mxu0 %v214
    %300 = vmatpush2.msra.mxu0 %v213
    %301 = vmatprep.subr.mxu0 %v208
    %302 = vmatpush2.msra.mxu0 %v207
    %303 = vmatprep.subr.mxu0 %v202
    %304 = vmatpush2.msra.mxu0 %v201
    %305 = vmatprep.subr.mxu0 %v196
    %306 = vmatpush2.msra.mxu0 %v195
    %307 = vmatprep.subr.mxu0 %v190
    %308 = vmatpush2.msra.mxu0 %v189
    %309 = vmatprep.subr.mxu0 %v184
    %310 = vmatpush2.msra.mxu0 %v183
    %311 = vmatprep.subr.mxu0 %v178
    %312 = vmatpush2.msra.mxu0 %v177
    %313 = vmatprep.subr.mxu0 %v172
    %314 = vmatpush2.msra.mxu0 %v171
    %315 = vmatprep.subr.mxu0 %v166
    %316 = vmatpush2.msra.mxu0 %v165
    %317 = vmatprep.subr.mxu0 %v160
    %318 = vmatpush2.msra.mxu0 %v159
    %319 = vmatprep.mubr.f32.mxu0 %v60
    %320 = vmatmul.mubr.f32.gmra.mxu0 %v59
    %v321 = vpop.f32.mrf.mxu0
    %v322 = vadd.f32 0.0, %v321
    %v323 = vpop.f32.mrf.mxu0
    %v324 = vadd.f32 0.0, %v323
    %325 = vmatprep.mubr.f32.mxu0 %v62
    %326 = vmatmul.mubr.f32.gmra.mxu0 %v61
    %v327 = vpop.f32.mrf.mxu0
    %v328 = vadd.f32 0.0, %v327
    %v329 = vpop.f32.mrf.mxu0
    %v330 = vadd.f32 0.0, %v329
    %331 = vdwg.mxu0
    %332 = vmatprep.subr.mxu0 %v156
    %333 = vmatpush1.msra.mxu0 %v155
    %334 = vmatprep.subr.mxu0 %v150
    %335 = vmatpush1.msra.mxu0 %v149
    %336 = vmatprep.subr.mxu0 %v144
    %337 = vmatpush1.msra.mxu0 %v143
    %338 = vmatprep.subr.mxu0 %v138
    %339 = vmatpush1.msra.mxu0 %v137
    %340 = vmatprep.subr.mxu0 %v132
    %341 = vmatpush1.msra.mxu0 %v131
    %342 = vmatprep.subr.mxu0 %v126
    %343 = vmatpush1.msra.mxu0 %v125
    %344 = vmatprep.subr.mxu0 %v120
    %345 = vmatpush1.msra.mxu0 %v119
    %346 = vmatprep.subr.mxu0 %v114
    %347 = vmatpush1.msra.mxu0 %v113
    %348 = vmatprep.subr.mxu0 %v108
    %349 = vmatpush1.msra.mxu0 %v107
    %350 = vmatprep.subr.mxu0 %v102
    %351 = vmatpush1.msra.mxu0 %v101
    %352 = vmatprep.subr.mxu0 %v96
    %353 = vmatpush1.msra.mxu0 %v95
    %354 = vmatprep.subr.mxu0 %v90
    %355 = vmatpush1.msra.mxu0 %v89
    %356 = vmatprep.subr.mxu0 %v84
    %357 = vmatpush1.msra.mxu0 %v83
    %358 = vmatprep.subr.mxu0 %v78
    %359 = vmatpush1.msra.mxu0 %v77
    %360 = vmatprep.subr.mxu0 %v72
    %361 = vmatpush1.msra.mxu0 %v71
    %362 = vmatprep.subr.mxu0 %v66
    %363 = vmatpush1.msra.mxu0 %v65
    %364 = vmatprep.subr.mxu0 %v252
    %365 = vmatpush2.msra.mxu0 %v251
    %366 = vmatprep.subr.mxu0 %v246
    %367 = vmatpush2.msra.mxu0 %v245
    %368 = vmatprep.subr.mxu0 %v240
    %369 = vmatpush2.msra.mxu0 %v239
    %370 = vmatprep.subr.mxu0 %v234
    %371 = vmatpush2.msra.mxu0 %v233
    %372 = vmatprep.subr.mxu0 %v228
    %373 = vmatpush2.msra.mxu0 %v227
    %374 = vmatprep.subr.mxu0 %v222
    %375 = vmatpush2.msra.mxu0 %v221
    %376 = vmatprep.subr.mxu0 %v216
    %377 = vmatpush2.msra.mxu0 %v215
    %378 = vmatprep.subr.mxu0 %v210
    %379 = vmatpush2.msra.mxu0 %v209
    %380 = vmatprep.subr.mxu0 %v204
    %381 = vmatpush2.msra.mxu0 %v203
    %382 = vmatprep.subr.mxu0 %v198
    %383 = vmatpush2.msra.mxu0 %v197
    %384 = vmatprep.subr.mxu0 %v192
    %385 = vmatpush2.msra.mxu0 %v191
    %386 = vmatprep.subr.mxu0 %v186
    %387 = vmatpush2.msra.mxu0 %v185
    %388 = vmatprep.subr.mxu0 %v180
    %389 = vmatpush2.msra.mxu0 %v179
    %390 = vmatprep.subr.mxu0 %v174
    %391 = vmatpush2.msra.mxu0 %v173
    %392 = vmatprep.subr.mxu0 %v168
    %393 = vmatpush2.msra.mxu0 %v167
    %394 = vmatprep.subr.mxu0 %v162
    %395 = vmatpush2.msra.mxu0 %v161
    %396 = vmatprep.mubr.f32.mxu0 %v60
    %397 = vmatmul.mubr.f32.gmra.mxu0 %v59
    %v398 = vpop.f32.mrf.mxu0
    %v399 = vadd.f32 0.0, %v398
    %v400 = vpop.f32.mrf.mxu0
    %v401 = vadd.f32 0.0, %v400
    %402 = vmatprep.mubr.f32.mxu0 %v62
    %403 = vmatmul.mubr.f32.gmra.mxu0 %v61
    %v404 = vpop.f32.mrf.mxu0
    %v405 = vadd.f32 0.0, %v404
    %v406 = vpop.f32.mrf.mxu0
    %v407 = vadd.f32 0.0, %v406
    %408 = vdwg.mxu0
    %409 = vmatprep.subr.mxu0 %v158
    %410 = vmatpush1.msra.mxu0 %v157
    %411 = vmatprep.subr.mxu0 %v152
    %412 = vmatpush1.msra.mxu0 %v151
    %413 = vmatprep.subr.mxu0 %v146
    %414 = vmatpush1.msra.mxu0 %v145
    %415 = vmatprep.subr.mxu0 %v140
    %416 = vmatpush1.msra.mxu0 %v139
    %417 = vmatprep.subr.mxu0 %v134
    %418 = vmatpush1.msra.mxu0 %v133
    %419 = vmatprep.subr.mxu0 %v128
    %420 = vmatpush1.msra.mxu0 %v127
    %421 = vmatprep.subr.mxu0 %v122
    %422 = vmatpush1.msra.mxu0 %v121
    %423 = vmatprep.subr.mxu0 %v116
    %424 = vmatpush1.msra.mxu0 %v115
    %425 = vmatprep.subr.mxu0 %v110
    %426 = vmatpush1.msra.mxu0 %v109
    %427 = vmatprep.subr.mxu0 %v104
    %428 = vmatpush1.msra.mxu0 %v103
    %429 = vmatprep.subr.mxu0 %v98
    %430 = vmatpush1.msra.mxu0 %v97
    %431 = vmatprep.subr.mxu0 %v92
    %432 = vmatpush1.msra.mxu0 %v91
    %433 = vmatprep.subr.mxu0 %v86
    %434 = vmatpush1.msra.mxu0 %v85
    %435 = vmatprep.subr.mxu0 %v80
    %436 = vmatpush1.msra.mxu0 %v79
    %437 = vmatprep.subr.mxu0 %v74
    %438 = vmatpush1.msra.mxu0 %v73
    %439 = vmatprep.subr.mxu0 %v68
    %440 = vmatpush1.msra.mxu0 %v67
    %441 = vmatprep.subr.mxu0 %v254
    %442 = vmatpush2.msra.mxu0 %v253
    %443 = vmatprep.subr.mxu0 %v248
    %444 = vmatpush2.msra.mxu0 %v247
    %445 = vmatprep.subr.mxu0 %v242
    %446 = vmatpush2.msra.mxu0 %v241
    %447 = vmatprep.subr.mxu0 %v236
    %448 = vmatpush2.msra.mxu0 %v235
    %449 = vmatprep.subr.mxu0 %v230
    %450 = vmatpush2.msra.mxu0 %v229
    %451 = vmatprep.subr.mxu0 %v224
    %452 = vmatpush2.msra.mxu0 %v223
    %453 = vmatprep.subr.mxu0 %v218
    %454 = vmatpush2.msra.mxu0 %v217
    %455 = vmatprep.subr.mxu0 %v212
    %456 = vmatpush2.msra.mxu0 %v211
    %457 = vmatprep.subr.mxu0 %v206
    %458 = vmatpush2.msra.mxu0 %v205
    %459 = vmatprep.subr.mxu0 %v200
    %460 = vmatpush2.msra.mxu0 %v199
    %461 = vmatprep.subr.mxu0 %v194
    %462 = vmatpush2.msra.mxu0 %v193
    %463 = vmatprep.subr.mxu0 %v188
    %464 = vmatpush2.msra.mxu0 %v187
    %465 = vmatprep.subr.mxu0 %v182
    %466 = vmatpush2.msra.mxu0 %v181
    %467 = vmatprep.subr.mxu0 %v176
    %468 = vmatpush2.msra.mxu0 %v175
    %469 = vmatprep.subr.mxu0 %v170
    %470 = vmatpush2.msra.mxu0 %v169
    %471 = vmatprep.subr.mxu0 %v164
    %472 = vmatpush2.msra.mxu0 %v163
    %473 = vmatprep.mubr.f32.mxu0 %v60
    %474 = vmatmul.mubr.f32.gmra.mxu0 %v59
    %v475 = vpop.f32.mrf.mxu0
    %v476 = vadd.f32 0.0, %v475
    %v477 = vpop.f32.mrf.mxu0
    %v478 = vadd.f32 0.0, %v477
    %479 = vmatprep.mubr.f32.mxu0 %v62
    %480 = vmatmul.mubr.f32.gmra.mxu0 %v61
    %v481 = vpop.f32.mrf.mxu0
    %v482 = vadd.f32 0.0, %v481
    %v483 = vpop.f32.mrf.mxu0
    %v484 = vadd.f32 0.0, %v483
    %485 = vdwg.mxu0
    %488 = vrot.lane.b32.xlu0 %v322, 64
    %v489 = vpop.permute.xlu0 %488
    %490 = vrot.lane.b32.xlu0 %v328, 64
    %v491 = vpop.permute.xlu0 %490
    %496 = vrot.lane.b32.xlu0 %v324, 64
    %v497 = vpop.permute.xlu0 %496
    %498 = vrot.lane.b32.xlu0 %v330, 64
    %v499 = vpop.permute.xlu0 %498
    %v502 = vcombine.low %v322, %v324
    %v503 = vcombine.high %v322, %v324
    %v505 = vunpack.c.l.s4 1983009808
    %v506 = vunpack.c.0.s8 %v505
    %v507 = vlaneseq
    %v508 = vshrl.u32 %v507, 7
    %v509 = vsub.s32 %v506, %v508
    %v510 = vrot.slane %v502, %v509
    %v512 = vunpack.c.l.s4 1983009808
    %v513 = vunpack.c.0.s8 %v512
    %v514 = vlaneseq
    %v515 = vshrl.u32 %v514, 7
    %v516 = vsub.s32 %v513, %v515
    %v517 = vrot.slane %v503, %v516
    %v518 = vcombine.low %v489, %v497
    %v519 = vcombine.high %v489, %v497
    %v521 = vunpack.c.l.s4 1983009808
    %v522 = vunpack.c.0.s8 %v521
    %v523 = vlaneseq
    %v524 = vshrl.u32 %v523, 7
    %v525 = vsub.s32 %v522, %v524
    %v526 = vrot.slane %v518, %v525
    %v528 = vunpack.c.l.s4 1983009808
    %v529 = vunpack.c.0.s8 %v528
    %v530 = vlaneseq
    %v531 = vshrl.u32 %v530, 7
    %v532 = vsub.s32 %v529, %v531
    %v533 = vrot.slane %v519, %v532
    %v534 = vcombine.low %v510, %v526
    %v535 = vcombine.high %v510, %v526
    %v537 = vunpack.c.l.s4 1934713408
    %v538 = vunpack.c.0.s8 %v537
    %v539 = vlaneseq
    %v540 = vshrl.u32 %v539, 7
    %v541 = vsub.s32 %v538, %v540
    %v542 = vrot.slane %v534, %v541
    %v544 = vunpack.c.l.s4 1934713408
    %v545 = vunpack.c.0.s8 %v544
    %v546 = vlaneseq
    %v547 = vshrl.u32 %v546, 7
    %v548 = vsub.s32 %v545, %v547
    %v549 = vrot.slane %v535, %v548
    %v550 = vcombine.low %v517, %v533
    %v551 = vcombine.high %v517, %v533
    %v553 = vunpack.c.l.s4 1934713408
    %v554 = vunpack.c.0.s8 %v553
    %v555 = vlaneseq
    %v556 = vshrl.u32 %v555, 7
    %v557 = vsub.s32 %v554, %v556
    %v558 = vrot.slane %v550, %v557
    %v560 = vunpack.c.l.s4 1934713408
    %v561 = vunpack.c.0.s8 %v560
    %v562 = vlaneseq
    %v563 = vshrl.u32 %v562, 7
    %v564 = vsub.s32 %v561, %v563
    %v565 = vrot.slane %v551, %v564
    %v566 = vcombine.high %v542, 0.0
    %v567 = vcombine.high %v549, 0.0
    %v568 = vcombine.high %v558, 0.0
    %v569 = vcombine.high %v565, 0.0
    %v570 = vcombine.low %v328, %v330
    %v571 = vcombine.high %v328, %v330
    %v573 = vunpack.c.l.s4 1983009808
    %v574 = vunpack.c.0.s8 %v573
    %v575 = vlaneseq
    %v576 = vshrl.u32 %v575, 7
    %v577 = vsub.s32 %v574, %v576
    %v578 = vrot.slane %v570, %v577
    %v580 = vunpack.c.l.s4 1983009808
    %v581 = vunpack.c.0.s8 %v580
    %v582 = vlaneseq
    %v583 = vshrl.u32 %v582, 7
    %v584 = vsub.s32 %v581, %v583
    %v585 = vrot.slane %v571, %v584
    %v586 = vcombine.low %v491, %v499
    %v587 = vcombine.high %v491, %v499
    %v589 = vunpack.c.l.s4 1983009808
    %v590 = vunpack.c.0.s8 %v589
    %v591 = vlaneseq
    %v592 = vshrl.u32 %v591, 7
    %v593 = vsub.s32 %v590, %v592
    %v594 = vrot.slane %v586, %v593
    %v596 = vunpack.c.l.s4 1983009808
    %v597 = vunpack.c.0.s8 %v596
    %v598 = vlaneseq
    %v599 = vshrl.u32 %v598, 7
    %v600 = vsub.s32 %v597, %v599
    %v601 = vrot.slane %v587, %v600
    %v602 = vcombine.low %v578, %v594
    %v603 = vcombine.high %v578, %v594
    %v605 = vunpack.c.l.s4 1934713408
    %v606 = vunpack.c.0.s8 %v605
    %v607 = vlaneseq
    %v608 = vshrl.u32 %v607, 7
    %v609 = vsub.s32 %v606, %v608
    %v610 = vrot.slane %v602, %v609
    %v612 = vunpack.c.l.s4 1934713408
    %v613 = vunpack.c.0.s8 %v612
    %v614 = vlaneseq
    %v615 = vshrl.u32 %v614, 7
    %v616 = vsub.s32 %v613, %v615
    %v617 = vrot.slane %v603, %v616
    %v618 = vcombine.low %v585, %v601
    %v619 = vcombine.high %v585, %v601
    %v621 = vunpack.c.l.s4 1934713408
    %v622 = vunpack.c.0.s8 %v621
    %v623 = vlaneseq
    %v624 = vshrl.u32 %v623, 7
    %v625 = vsub.s32 %v622, %v624
    %v626 = vrot.slane %v618, %v625
    %v628 = vunpack.c.l.s4 1934713408
    %v629 = vunpack.c.0.s8 %v628
    %v630 = vlaneseq
    %v631 = vshrl.u32 %v630, 7
    %v632 = vsub.s32 %v629, %v631
    %v633 = vrot.slane %v619, %v632
    %v634 = vcombine.high %v610, 0.0
    %v635 = vcombine.high %v617, 0.0
    %v636 = vcombine.high %v626, 0.0
    %v637 = vcombine.high %v633, 0.0
    %v638 = vcombine.low %v542, %v549
    %v640 = vunpack.c.l.s4 1983009808
    %v641 = vunpack.c.0.s8 %v640
    %v642 = vlaneseq
    %v643 = vshrl.u32 %v642, 7
    %v644 = vsub.s32 %v641, %v643
    %v645 = vrot.slane %v638, %v644
    %v646 = vcombine.low %v566, %v567
    %v648 = vunpack.c.l.s4 1983009808
    %v649 = vunpack.c.0.s8 %v648
    %v650 = vlaneseq
    %v651 = vshrl.u32 %v650, 7
    %v652 = vsub.s32 %v649, %v651
    %v653 = vrot.slane %v646, %v652
    %v654 = vcombine.low %v558, %v565
    %v656 = vunpack.c.l.s4 1983009808
    %v657 = vunpack.c.0.s8 %v656
    %v658 = vlaneseq
    %v659 = vshrl.u32 %v658, 7
    %v660 = vsub.s32 %v657, %v659
    %v661 = vrot.slane %v654, %v660
    %v662 = vcombine.low %v568, %v569
    %v664 = vunpack.c.l.s4 1983009808
    %v665 = vunpack.c.0.s8 %v664
    %v666 = vlaneseq
    %v667 = vshrl.u32 %v666, 7
    %v668 = vsub.s32 %v665, %v667
    %v669 = vrot.slane %v662, %v668
    %v670 = vcombine.low %v645, %v653
    %v671 = vcombine.high %v645, %v653
    %v673 = vunpack.c.l.s4 1934713408
    %v674 = vunpack.c.0.s8 %v673
    %v675 = vlaneseq
    %v676 = vshrl.u32 %v675, 7
    %v677 = vsub.s32 %v674, %v676
    %v678 = vrot.slane %v670, %v677
    %v680 = vunpack.c.l.s4 1934713408
    %v681 = vunpack.c.0.s8 %v680
    %v682 = vlaneseq
    %v683 = vshrl.u32 %v682, 7
    %v684 = vsub.s32 %v681, %v683
    %v685 = vrot.slane %v671, %v684
    %v686 = vcombine.low %v661, %v669
    %v687 = vcombine.high %v661, %v669
    %v689 = vunpack.c.l.s4 1934713408
    %v690 = vunpack.c.0.s8 %v689
    %v691 = vlaneseq
    %v692 = vshrl.u32 %v691, 7
    %v693 = vsub.s32 %v690, %v692
    %v694 = vrot.slane %v686, %v693
    %v696 = vunpack.c.l.s4 1934713408
    %v697 = vunpack.c.0.s8 %v696
    %v698 = vlaneseq
    %v699 = vshrl.u32 %v698, 7
    %v700 = vsub.s32 %v697, %v699
    %v701 = vrot.slane %v687, %v700
    %v702 = vcombine.low %v678, %v694
    %v703 = vcombine.high %v678, %v694
    %v704 = vcombine.low %v685, %v701
    %v705 = vcombine.high %v685, %v701
    %v706 = vcombine.low %v610, %v617
    %v708 = vunpack.c.l.s4 1983009808
    %v709 = vunpack.c.0.s8 %v708
    %v710 = vlaneseq
    %v711 = vshrl.u32 %v710, 7
    %v712 = vsub.s32 %v709, %v711
    %v713 = vrot.slane %v706, %v712
    %v714 = vcombine.low %v634, %v635
    %v716 = vunpack.c.l.s4 1983009808
    %v717 = vunpack.c.0.s8 %v716
    %v718 = vlaneseq
    %v719 = vshrl.u32 %v718, 7
    %v720 = vsub.s32 %v717, %v719
    %v721 = vrot.slane %v714, %v720
    %v722 = vcombine.low %v626, %v633
    %v724 = vunpack.c.l.s4 1983009808
    %v725 = vunpack.c.0.s8 %v724
    %v726 = vlaneseq
    %v727 = vshrl.u32 %v726, 7
    %v728 = vsub.s32 %v725, %v727
    %v729 = vrot.slane %v722, %v728
    %v730 = vcombine.low %v636, %v637
    %v732 = vunpack.c.l.s4 1983009808
    %v733 = vunpack.c.0.s8 %v732
    %v734 = vlaneseq
    %v735 = vshrl.u32 %v734, 7
    %v736 = vsub.s32 %v733, %v735
    %v737 = vrot.slane %v730, %v736
    %v738 = vcombine.low %v713, %v721
    %v739 = vcombine.high %v713, %v721
    %v741 = vunpack.c.l.s4 1934713408
    %v742 = vunpack.c.0.s8 %v741
    %v743 = vlaneseq
    %v744 = vshrl.u32 %v743, 7
    %v745 = vsub.s32 %v742, %v744
    %v746 = vrot.slane %v738, %v745
    %v748 = vunpack.c.l.s4 1934713408
    %v749 = vunpack.c.0.s8 %v748
    %v750 = vlaneseq
    %v751 = vshrl.u32 %v750, 7
    %v752 = vsub.s32 %v749, %v751
    %v753 = vrot.slane %v739, %v752
    %v754 = vcombine.low %v729, %v737
    %v755 = vcombine.high %v729, %v737
    %v757 = vunpack.c.l.s4 1934713408
    %v758 = vunpack.c.0.s8 %v757
    %v759 = vlaneseq
    %v760 = vshrl.u32 %v759, 7
    %v761 = vsub.s32 %v758, %v760
    %v762 = vrot.slane %v754, %v761
    %v764 = vunpack.c.l.s4 1934713408
    %v765 = vunpack.c.0.s8 %v764
    %v766 = vlaneseq
    %v767 = vshrl.u32 %v766, 7
    %v768 = vsub.s32 %v765, %v767
    %v769 = vrot.slane %v755, %v768
    %v770 = vcombine.low %v746, %v762
    %v771 = vcombine.high %v746, %v762
    %v772 = vcombine.low %v753, %v769
    %v773 = vcombine.high %v753, %v769
    %776 = vrot.lane.b32.xlu0 %v399, 64
    %v777 = vpop.permute.xlu0 %776
    %778 = vrot.lane.b32.xlu0 %v405, 64
    %v779 = vpop.permute.xlu0 %778
    %784 = vrot.lane.b32.xlu0 %v401, 64
    %v785 = vpop.permute.xlu0 %784
    %786 = vrot.lane.b32.xlu0 %v407, 64
    %v787 = vpop.permute.xlu0 %786
    %v790 = vcombine.low %v399, %v401
    %v791 = vcombine.high %v399, %v401
    %v793 = vunpack.c.l.s4 1983009808
    %v794 = vunpack.c.0.s8 %v793
    %v795 = vlaneseq
    %v796 = vshrl.u32 %v795, 7
    %v797 = vsub.s32 %v794, %v796
    %v798 = vrot.slane %v790, %v797
    %v800 = vunpack.c.l.s4 1983009808
    %v801 = vunpack.c.0.s8 %v800
    %v802 = vlaneseq
    %v803 = vshrl.u32 %v802, 7
    %v804 = vsub.s32 %v801, %v803
    %v805 = vrot.slane %v791, %v804
    %v806 = vcombine.low %v777, %v785
    %v807 = vcombine.high %v777, %v785
    %v809 = vunpack.c.l.s4 1983009808
    %v810 = vunpack.c.0.s8 %v809
    %v811 = vlaneseq
    %v812 = vshrl.u32 %v811, 7
    %v813 = vsub.s32 %v810, %v812
    %v814 = vrot.slane %v806, %v813
    %v816 = vunpack.c.l.s4 1983009808
    %v817 = vunpack.c.0.s8 %v816
    %v818 = vlaneseq
    %v819 = vshrl.u32 %v818, 7
    %v820 = vsub.s32 %v817, %v819
    %v821 = vrot.slane %v807, %v820
    %v822 = vcombine.low %v798, %v814
    %v823 = vcombine.high %v798, %v814
    %v825 = vunpack.c.l.s4 1934713408
    %v826 = vunpack.c.0.s8 %v825
    %v827 = vlaneseq
    %v828 = vshrl.u32 %v827, 7
    %v829 = vsub.s32 %v826, %v828
    %v830 = vrot.slane %v822, %v829
    %v832 = vunpack.c.l.s4 1934713408
    %v833 = vunpack.c.0.s8 %v832
    %v834 = vlaneseq
    %v835 = vshrl.u32 %v834, 7
    %v836 = vsub.s32 %v833, %v835
    %v837 = vrot.slane %v823, %v836
    %v838 = vcombine.low %v805, %v821
    %v839 = vcombine.high %v805, %v821
    %v841 = vunpack.c.l.s4 1934713408
    %v842 = vunpack.c.0.s8 %v841
    %v843 = vlaneseq
    %v844 = vshrl.u32 %v843, 7
    %v845 = vsub.s32 %v842, %v844
    %v846 = vrot.slane %v838, %v845
    %v848 = vunpack.c.l.s4 1934713408
    %v849 = vunpack.c.0.s8 %v848
    %v850 = vlaneseq
    %v851 = vshrl.u32 %v850, 7
    %v852 = vsub.s32 %v849, %v851
    %v853 = vrot.slane %v839, %v852
    %v854 = vcombine.high %v830, 0.0
    %v855 = vcombine.high %v837, 0.0
    %v856 = vcombine.high %v846, 0.0
    %v857 = vcombine.high %v853, 0.0
    %v858 = vcombine.low %v405, %v407
    %v859 = vcombine.high %v405, %v407
    %v861 = vunpack.c.l.s4 1983009808
    %v862 = vunpack.c.0.s8 %v861
    %v863 = vlaneseq
    %v864 = vshrl.u32 %v863, 7
    %v865 = vsub.s32 %v862, %v864
    %v866 = vrot.slane %v858, %v865
    %v868 = vunpack.c.l.s4 1983009808
    %v869 = vunpack.c.0.s8 %v868
    %v870 = vlaneseq
    %v871 = vshrl.u32 %v870, 7
    %v872 = vsub.s32 %v869, %v871
    %v873 = vrot.slane %v859, %v872
    %v874 = vcombine.low %v779, %v787
    %v875 = vcombine.high %v779, %v787
    %v877 = vunpack.c.l.s4 1983009808
    %v878 = vunpack.c.0.s8 %v877
    %v879 = vlaneseq
    %v880 = vshrl.u32 %v879, 7
    %v881 = vsub.s32 %v878, %v880
    %v882 = vrot.slane %v874, %v881
    %v884 = vunpack.c.l.s4 1983009808
    %v885 = vunpack.c.0.s8 %v884
    %v886 = vlaneseq
    %v887 = vshrl.u32 %v886, 7
    %v888 = vsub.s32 %v885, %v887
    %v889 = vrot.slane %v875, %v888
    %v890 = vcombine.low %v866, %v882
    %v891 = vcombine.high %v866, %v882
    %v893 = vunpack.c.l.s4 1934713408
    %v894 = vunpack.c.0.s8 %v893
    %v895 = vlaneseq
    %v896 = vshrl.u32 %v895, 7
    %v897 = vsub.s32 %v894, %v896
    %v898 = vrot.slane %v890, %v897
    %v900 = vunpack.c.l.s4 1934713408
    %v901 = vunpack.c.0.s8 %v900
    %v902 = vlaneseq
    %v903 = vshrl.u32 %v902, 7
    %v904 = vsub.s32 %v901, %v903
    %v905 = vrot.slane %v891, %v904
    %v906 = vcombine.low %v873, %v889
    %v907 = vcombine.high %v873, %v889
    %v909 = vunpack.c.l.s4 1934713408
    %v910 = vunpack.c.0.s8 %v909
    %v911 = vlaneseq
    %v912 = vshrl.u32 %v911, 7
    %v913 = vsub.s32 %v910, %v912
    %v914 = vrot.slane %v906, %v913
    %v916 = vunpack.c.l.s4 1934713408
    %v917 = vunpack.c.0.s8 %v916
    %v918 = vlaneseq
    %v919 = vshrl.u32 %v918, 7
    %v920 = vsub.s32 %v917, %v919
    %v921 = vrot.slane %v907, %v920
    %v922 = vcombine.high %v898, 0.0
    %v923 = vcombine.high %v905, 0.0
    %v924 = vcombine.high %v914, 0.0
    %v925 = vcombine.high %v921, 0.0
    %v926 = vcombine.low %v830, %v837
    %v928 = vunpack.c.l.s4 1983009808
    %v929 = vunpack.c.0.s8 %v928
    %v930 = vlaneseq
    %v931 = vshrl.u32 %v930, 7
    %v932 = vsub.s32 %v929, %v931
    %v933 = vrot.slane %v926, %v932
    %v934 = vcombine.low %v854, %v855
    %v936 = vunpack.c.l.s4 1983009808
    %v937 = vunpack.c.0.s8 %v936
    %v938 = vlaneseq
    %v939 = vshrl.u32 %v938, 7
    %v940 = vsub.s32 %v937, %v939
    %v941 = vrot.slane %v934, %v940
    %v942 = vcombine.low %v846, %v853
    %v944 = vunpack.c.l.s4 1983009808
    %v945 = vunpack.c.0.s8 %v944
    %v946 = vlaneseq
    %v947 = vshrl.u32 %v946, 7
    %v948 = vsub.s32 %v945, %v947
    %v949 = vrot.slane %v942, %v948
    %v950 = vcombine.low %v856, %v857
    %v952 = vunpack.c.l.s4 1983009808
    %v953 = vunpack.c.0.s8 %v952
    %v954 = vlaneseq
    %v955 = vshrl.u32 %v954, 7
    %v956 = vsub.s32 %v953, %v955
    %v957 = vrot.slane %v950, %v956
    %v958 = vcombine.low %v933, %v941
    %v959 = vcombine.high %v933, %v941
    %v961 = vunpack.c.l.s4 1934713408
    %v962 = vunpack.c.0.s8 %v961
    %v963 = vlaneseq
    %v964 = vshrl.u32 %v963, 7
    %v965 = vsub.s32 %v962, %v964
    %v966 = vrot.slane %v958, %v965
    %v968 = vunpack.c.l.s4 1934713408
    %v969 = vunpack.c.0.s8 %v968
    %v970 = vlaneseq
    %v971 = vshrl.u32 %v970, 7
    %v972 = vsub.s32 %v969, %v971
    %v973 = vrot.slane %v959, %v972
    %v974 = vcombine.low %v949, %v957
    %v975 = vcombine.high %v949, %v957
    %v977 = vunpack.c.l.s4 1934713408
    %v978 = vunpack.c.0.s8 %v977
    %v979 = vlaneseq
    %v980 = vshrl.u32 %v979, 7
    %v981 = vsub.s32 %v978, %v980
    %v982 = vrot.slane %v974, %v981
    %v984 = vunpack.c.l.s4 1934713408
    %v985 = vunpack.c.0.s8 %v984
    %v986 = vlaneseq
    %v987 = vshrl.u32 %v986, 7
    %v988 = vsub.s32 %v985, %v987
    %v989 = vrot.slane %v975, %v988
    %v990 = vcombine.low %v966, %v982
    %v991 = vcombine.high %v966, %v982
    %v992 = vcombine.low %v973, %v989
    %v993 = vcombine.high %v973, %v989
    %v994 = vcombine.low %v898, %v905
    %v996 = vunpack.c.l.s4 1983009808
    %v997 = vunpack.c.0.s8 %v996
    %v998 = vlaneseq
    %v999 = vshrl.u32 %v998, 7
    %v1000 = vsub.s32 %v997, %v999
    %v1001 = vrot.slane %v994, %v1000
    %v1002 = vcombine.low %v922, %v923
    %v1004 = vunpack.c.l.s4 1983009808
    %v1005 = vunpack.c.0.s8 %v1004
    %v1006 = vlaneseq
    %v1007 = vshrl.u32 %v1006, 7
    %v1008 = vsub.s32 %v1005, %v1007
    %v1009 = vrot.slane %v1002, %v1008
    %v1010 = vcombine.low %v914, %v921
    %v1012 = vunpack.c.l.s4 1983009808
    %v1013 = vunpack.c.0.s8 %v1012
    %v1014 = vlaneseq
    %v1015 = vshrl.u32 %v1014, 7
    %v1016 = vsub.s32 %v1013, %v1015
    %v1017 = vrot.slane %v1010, %v1016
    %v1018 = vcombine.low %v924, %v925
    %v1020 = vunpack.c.l.s4 1983009808
    %v1021 = vunpack.c.0.s8 %v1020
    %v1022 = vlaneseq
    %v1023 = vshrl.u32 %v1022, 7
    %v1024 = vsub.s32 %v1021, %v1023
    %v1025 = vrot.slane %v1018, %v1024
    %v1026 = vcombine.low %v1001, %v1009
    %v1027 = vcombine.high %v1001, %v1009
    %v1029 = vunpack.c.l.s4 1934713408
    %v1030 = vunpack.c.0.s8 %v1029
    %v1031 = vlaneseq
    %v1032 = vshrl.u32 %v1031, 7
    %v1033 = vsub.s32 %v1030, %v1032
    %v1034 = vrot.slane %v1026, %v1033
    %v1036 = vunpack.c.l.s4 1934713408
    %v1037 = vunpack.c.0.s8 %v1036
    %v1038 = vlaneseq
    %v1039 = vshrl.u32 %v1038, 7
    %v1040 = vsub.s32 %v1037, %v1039
    %v1041 = vrot.slane %v1027, %v1040
    %v1042 = vcombine.low %v1017, %v1025
    %v1043 = vcombine.high %v1017, %v1025
    %v1045 = vunpack.c.l.s4 1934713408
    %v1046 = vunpack.c.0.s8 %v1045
    %v1047 = vlaneseq
    %v1048 = vshrl.u32 %v1047, 7
    %v1049 = vsub.s32 %v1046, %v1048
    %v1050 = vrot.slane %v1042, %v1049
    %v1052 = vunpack.c.l.s4 1934713408
    %v1053 = vunpack.c.0.s8 %v1052
    %v1054 = vlaneseq
    %v1055 = vshrl.u32 %v1054, 7
    %v1056 = vsub.s32 %v1053, %v1055
    %v1057 = vrot.slane %v1043, %v1056
    %v1058 = vcombine.low %v1034, %v1050
    %v1059 = vcombine.high %v1034, %v1050
    %v1060 = vcombine.low %v1041, %v1057
    %v1061 = vcombine.high %v1041, %v1057
    %1064 = vrot.lane.b32.xlu0 %v476, 64
    %v1065 = vpop.permute.xlu0 %1064
    %1066 = vrot.lane.b32.xlu0 %v482, 64
    %v1067 = vpop.permute.xlu0 %1066
    %1072 = vrot.lane.b32.xlu0 %v478, 64
    %v1073 = vpop.permute.xlu0 %1072
    %1074 = vrot.lane.b32.xlu0 %v484, 64
    %v1075 = vpop.permute.xlu0 %1074
    %v1078 = vcombine.low %v476, %v478
    %v1079 = vcombine.high %v476, %v478
    %v1081 = vunpack.c.l.s4 1983009808
    %v1082 = vunpack.c.0.s8 %v1081
    %v1083 = vlaneseq
    %v1084 = vshrl.u32 %v1083, 7
    %v1085 = vsub.s32 %v1082, %v1084
    %v1086 = vrot.slane %v1078, %v1085
    %v1088 = vunpack.c.l.s4 1983009808
    %v1089 = vunpack.c.0.s8 %v1088
    %v1090 = vlaneseq
    %v1091 = vshrl.u32 %v1090, 7
    %v1092 = vsub.s32 %v1089, %v1091
    %v1093 = vrot.slane %v1079, %v1092
    %v1094 = vcombine.low %v1065, %v1073
    %v1095 = vcombine.high %v1065, %v1073
    %v1097 = vunpack.c.l.s4 1983009808
    %v1098 = vunpack.c.0.s8 %v1097
    %v1099 = vlaneseq
    %v1100 = vshrl.u32 %v1099, 7
    %v1101 = vsub.s32 %v1098, %v1100
    %v1102 = vrot.slane %v1094, %v1101
    %v1104 = vunpack.c.l.s4 1983009808
    %v1105 = vunpack.c.0.s8 %v1104
    %v1106 = vlaneseq
    %v1107 = vshrl.u32 %v1106, 7
    %v1108 = vsub.s32 %v1105, %v1107
    %v1109 = vrot.slane %v1095, %v1108
    %v1110 = vcombine.low %v1086, %v1102
    %v1111 = vcombine.high %v1086, %v1102
    %v1113 = vunpack.c.l.s4 1934713408
    %v1114 = vunpack.c.0.s8 %v1113
    %v1115 = vlaneseq
    %v1116 = vshrl.u32 %v1115, 7
    %v1117 = vsub.s32 %v1114, %v1116
    %v1118 = vrot.slane %v1110, %v1117
    %v1120 = vunpack.c.l.s4 1934713408
    %v1121 = vunpack.c.0.s8 %v1120
    %v1122 = vlaneseq
    %v1123 = vshrl.u32 %v1122, 7
    %v1124 = vsub.s32 %v1121, %v1123
    %v1125 = vrot.slane %v1111, %v1124
    %v1126 = vcombine.low %v1093, %v1109
    %v1127 = vcombine.high %v1093, %v1109
    %v1129 = vunpack.c.l.s4 1934713408
    %v1130 = vunpack.c.0.s8 %v1129
    %v1131 = vlaneseq
    %v1132 = vshrl.u32 %v1131, 7
    %v1133 = vsub.s32 %v1130, %v1132
    %v1134 = vrot.slane %v1126, %v1133
    %v1136 = vunpack.c.l.s4 1934713408
    %v1137 = vunpack.c.0.s8 %v1136
    %v1138 = vlaneseq
    %v1139 = vshrl.u32 %v1138, 7
    %v1140 = vsub.s32 %v1137, %v1139
    %v1141 = vrot.slane %v1127, %v1140
    %v1142 = vcombine.high %v1118, 0.0
    %v1143 = vcombine.high %v1125, 0.0
    %v1144 = vcombine.high %v1134, 0.0
    %v1145 = vcombine.high %v1141, 0.0
    %v1146 = vcombine.low %v482, %v484
    %v1147 = vcombine.high %v482, %v484
    %v1149 = vunpack.c.l.s4 1983009808
    %v1150 = vunpack.c.0.s8 %v1149
    %v1151 = vlaneseq
    %v1152 = vshrl.u32 %v1151, 7
    %v1153 = vsub.s32 %v1150, %v1152
    %v1154 = vrot.slane %v1146, %v1153
    %v1156 = vunpack.c.l.s4 1983009808
    %v1157 = vunpack.c.0.s8 %v1156
    %v1158 = vlaneseq
    %v1159 = vshrl.u32 %v1158, 7
    %v1160 = vsub.s32 %v1157, %v1159
    %v1161 = vrot.slane %v1147, %v1160
    %v1162 = vcombine.low %v1067, %v1075
    %v1163 = vcombine.high %v1067, %v1075
    %v1165 = vunpack.c.l.s4 1983009808
    %v1166 = vunpack.c.0.s8 %v1165
    %v1167 = vlaneseq
    %v1168 = vshrl.u32 %v1167, 7
    %v1169 = vsub.s32 %v1166, %v1168
    %v1170 = vrot.slane %v1162, %v1169
    %v1172 = vunpack.c.l.s4 1983009808
    %v1173 = vunpack.c.0.s8 %v1172
    %v1174 = vlaneseq
    %v1175 = vshrl.u32 %v1174, 7
    %v1176 = vsub.s32 %v1173, %v1175
    %v1177 = vrot.slane %v1163, %v1176
    %v1178 = vcombine.low %v1154, %v1170
    %v1179 = vcombine.high %v1154, %v1170
    %v1181 = vunpack.c.l.s4 1934713408
    %v1182 = vunpack.c.0.s8 %v1181
    %v1183 = vlaneseq
    %v1184 = vshrl.u32 %v1183, 7
    %v1185 = vsub.s32 %v1182, %v1184
    %v1186 = vrot.slane %v1178, %v1185
    %v1188 = vunpack.c.l.s4 1934713408
    %v1189 = vunpack.c.0.s8 %v1188
    %v1190 = vlaneseq
    %v1191 = vshrl.u32 %v1190, 7
    %v1192 = vsub.s32 %v1189, %v1191
    %v1193 = vrot.slane %v1179, %v1192
    %v1194 = vcombine.low %v1161, %v1177
    %v1195 = vcombine.high %v1161, %v1177
    %v1197 = vunpack.c.l.s4 1934713408
    %v1198 = vunpack.c.0.s8 %v1197
    %v1199 = vlaneseq
    %v1200 = vshrl.u32 %v1199, 7
    %v1201 = vsub.s32 %v1198, %v1200
    %v1202 = vrot.slane %v1194, %v1201
    %v1204 = vunpack.c.l.s4 1934713408
    %v1205 = vunpack.c.0.s8 %v1204
    %v1206 = vlaneseq
    %v1207 = vshrl.u32 %v1206, 7
    %v1208 = vsub.s32 %v1205, %v1207
    %v1209 = vrot.slane %v1195, %v1208
    %v1210 = vcombine.high %v1186, 0.0
    %v1211 = vcombine.high %v1193, 0.0
    %v1212 = vcombine.high %v1202, 0.0
    %v1213 = vcombine.high %v1209, 0.0
    %v1214 = vcombine.low %v1118, %v1125
    %v1216 = vunpack.c.l.s4 1983009808
    %v1217 = vunpack.c.0.s8 %v1216
    %v1218 = vlaneseq
    %v1219 = vshrl.u32 %v1218, 7
    %v1220 = vsub.s32 %v1217, %v1219
    %v1221 = vrot.slane %v1214, %v1220
    %v1222 = vcombine.low %v1142, %v1143
    %v1224 = vunpack.c.l.s4 1983009808
    %v1225 = vunpack.c.0.s8 %v1224
    %v1226 = vlaneseq
    %v1227 = vshrl.u32 %v1226, 7
    %v1228 = vsub.s32 %v1225, %v1227
    %v1229 = vrot.slane %v1222, %v1228
    %v1230 = vcombine.low %v1134, %v1141
    %v1232 = vunpack.c.l.s4 1983009808
    %v1233 = vunpack.c.0.s8 %v1232
    %v1234 = vlaneseq
    %v1235 = vshrl.u32 %v1234, 7
    %v1236 = vsub.s32 %v1233, %v1235
    %v1237 = vrot.slane %v1230, %v1236
    %v1238 = vcombine.low %v1144, %v1145
    %v1240 = vunpack.c.l.s4 1983009808
    %v1241 = vunpack.c.0.s8 %v1240
    %v1242 = vlaneseq
    %v1243 = vshrl.u32 %v1242, 7
    %v1244 = vsub.s32 %v1241, %v1243
    %v1245 = vrot.slane %v1238, %v1244
    %v1246 = vcombine.low %v1221, %v1229
    %v1247 = vcombine.high %v1221, %v1229
    %v1249 = vunpack.c.l.s4 1934713408
    %v1250 = vunpack.c.0.s8 %v1249
    %v1251 = vlaneseq
    %v1252 = vshrl.u32 %v1251, 7
    %v1253 = vsub.s32 %v1250, %v1252
    %v1254 = vrot.slane %v1246, %v1253
    %v1256 = vunpack.c.l.s4 1934713408
    %v1257 = vunpack.c.0.s8 %v1256
    %v1258 = vlaneseq
    %v1259 = vshrl.u32 %v1258, 7
    %v1260 = vsub.s32 %v1257, %v1259
    %v1261 = vrot.slane %v1247, %v1260
    %v1262 = vcombine.low %v1237, %v1245
    %v1263 = vcombine.high %v1237, %v1245
    %v1265 = vunpack.c.l.s4 1934713408
    %v1266 = vunpack.c.0.s8 %v1265
    %v1267 = vlaneseq
    %v1268 = vshrl.u32 %v1267, 7
    %v1269 = vsub.s32 %v1266, %v1268
    %v1270 = vrot.slane %v1262, %v1269
    %v1272 = vunpack.c.l.s4 1934713408
    %v1273 = vunpack.c.0.s8 %v1272
    %v1274 = vlaneseq
    %v1275 = vshrl.u32 %v1274, 7
    %v1276 = vsub.s32 %v1273, %v1275
    %v1277 = vrot.slane %v1263, %v1276
    %v1278 = vcombine.low %v1254, %v1270
    %v1279 = vcombine.high %v1254, %v1270
    %v1280 = vcombine.low %v1261, %v1277
    %v1281 = vcombine.high %v1261, %v1277
    %v1282 = vcombine.low %v1186, %v1193
    %v1284 = vunpack.c.l.s4 1983009808
    %v1285 = vunpack.c.0.s8 %v1284
    %v1286 = vlaneseq
    %v1287 = vshrl.u32 %v1286, 7
    %v1288 = vsub.s32 %v1285, %v1287
    %v1289 = vrot.slane %v1282, %v1288
    %v1290 = vcombine.low %v1210, %v1211
    %v1292 = vunpack.c.l.s4 1983009808
    %v1293 = vunpack.c.0.s8 %v1292
    %v1294 = vlaneseq
    %v1295 = vshrl.u32 %v1294, 7
    %v1296 = vsub.s32 %v1293, %v1295
    %v1297 = vrot.slane %v1290, %v1296
    %v1298 = vcombine.low %v1202, %v1209
    %v1300 = vunpack.c.l.s4 1983009808
    %v1301 = vunpack.c.0.s8 %v1300
    %v1302 = vlaneseq
    %v1303 = vshrl.u32 %v1302, 7
    %v1304 = vsub.s32 %v1301, %v1303
    %v1305 = vrot.slane %v1298, %v1304
    %v1306 = vcombine.low %v1212, %v1213
    %v1308 = vunpack.c.l.s4 1983009808
    %v1309 = vunpack.c.0.s8 %v1308
    %v1310 = vlaneseq
    %v1311 = vshrl.u32 %v1310, 7
    %v1312 = vsub.s32 %v1309, %v1311
    %v1313 = vrot.slane %v1306, %v1312
    %v1314 = vcombine.low %v1289, %v1297
    %v1315 = vcombine.high %v1289, %v1297
    %v1317 = vunpack.c.l.s4 1934713408
    %v1318 = vunpack.c.0.s8 %v1317
    %v1319 = vlaneseq
    %v1320 = vshrl.u32 %v1319, 7
    %v1321 = vsub.s32 %v1318, %v1320
    %v1322 = vrot.slane %v1314, %v1321
    %v1324 = vunpack.c.l.s4 1934713408
    %v1325 = vunpack.c.0.s8 %v1324
    %v1326 = vlaneseq
    %v1327 = vshrl.u32 %v1326, 7
    %v1328 = vsub.s32 %v1325, %v1327
    %v1329 = vrot.slane %v1315, %v1328
    %v1330 = vcombine.low %v1305, %v1313
    %v1331 = vcombine.high %v1305, %v1313
    %v1333 = vunpack.c.l.s4 1934713408
    %v1334 = vunpack.c.0.s8 %v1333
    %v1335 = vlaneseq
    %v1336 = vshrl.u32 %v1335, 7
    %v1337 = vsub.s32 %v1334, %v1336
    %v1338 = vrot.slane %v1330, %v1337
    %v1340 = vunpack.c.l.s4 1934713408
    %v1341 = vunpack.c.0.s8 %v1340
    %v1342 = vlaneseq
    %v1343 = vshrl.u32 %v1342, 7
    %v1344 = vsub.s32 %v1341, %v1343
    %v1345 = vrot.slane %v1331, %v1344
    %v1346 = vcombine.low %v1322, %v1338
    %v1347 = vcombine.high %v1322, %v1338
    %v1348 = vcombine.low %v1329, %v1345
    %v1349 = vcombine.high %v1329, %v1345
    %v1350 = vlaneseq
    %v1351 = vshrl.u32 %v1350, 7
    %v1352 = vlaneseq
    %v1353 = vand.u32 %v1352, 127
    %vm1354 = vcmp.le.s32.totalorder %v1353, %v1351
    %v1355 = vsel %vm1354, 0.0, -1e+30
    %vm1356 = vcmask 523264
    %v1358 = vsel %vm1356, %v702, 0
    %v1361 = vsel %vm1356, %v990, 0
    %1363 = vmatprep.subr.mxu0 0.0
    %1364 = vmatpush1.xpose.msra.mxu0 0.0
    %1365 = vmatprep.subr.mxu0 0.0
    %1366 = vmatpush1.xpose.msra.mxu0 0.0
    %1367 = vmatprep.subr.mxu0 0.0
    %1368 = vmatpush1.xpose.msra.mxu0 0.0
    %1369 = vmatprep.subr.mxu0 0.0
    %1370 = vmatpush1.xpose.msra.mxu0 0.0
    %1371 = vmatprep.subr.mxu0 0.0
    %1372 = vmatpush1.xpose.msra.mxu0 0.0
    %1373 = vmatprep.subr.mxu0 0.0
    %1374 = vmatpush1.xpose.msra.mxu0 0.0
    %1375 = vmatprep.subr.mxu0 0.0
    %1376 = vmatpush1.xpose.msra.mxu0 0.0
    %1377 = vmatprep.subr.mxu0 0.0
    %1378 = vmatpush1.xpose.msra.mxu0 0.0
    %1379 = vmatprep.subr.mxu0 0.0
    %1380 = vmatpush1.xpose.msra.mxu0 0.0
    %1381 = vmatprep.subr.mxu0 0.0
    %1382 = vmatpush1.xpose.msra.mxu0 0.0
    %1383 = vmatprep.subr.mxu0 0.0
    %1384 = vmatpush1.xpose.msra.mxu0 0.0
    %1385 = vmatprep.subr.mxu0 0.0
    %1386 = vmatpush1.xpose.msra.mxu0 0.0
    %1387 = vmatprep.subr.mxu0 0.0
    %1388 = vmatpush1.xpose.msra.mxu0 0.0
    %1389 = vmatprep.subr.mxu0 0.0
    %1390 = vmatpush1.xpose.msra.mxu0 0.0
    %1391 = vmatprep.subr.mxu0 0.0
    %1392 = vmatpush1.xpose.msra.mxu0 0.0
    %1393 = vmatprep.subr.mxu0 0.0
    %1394 = vmatpush1.xpose.msra.mxu0 %v1361
    %1395 = vmatprep.subr.mxu0 0.0
    %1396 = vmatpush2.xpose.msra.mxu0 0.0
    %1397 = vmatprep.subr.mxu0 0.0
    %1398 = vmatpush2.xpose.msra.mxu0 0.0
    %1399 = vmatprep.subr.mxu0 0.0
    %1400 = vmatpush2.xpose.msra.mxu0 0.0
    %1401 = vmatprep.subr.mxu0 0.0
    %1402 = vmatpush2.xpose.msra.mxu0 0.0
    %1403 = vmatprep.subr.mxu0 0.0
    %1404 = vmatpush2.xpose.msra.mxu0 0.0
    %1405 = vmatprep.subr.mxu0 0.0
    %1406 = vmatpush2.xpose.msra.mxu0 0.0
    %1407 = vmatprep.subr.mxu0 0.0
    %1408 = vmatpush2.xpose.msra.mxu0 0.0
    %1409 = vmatprep.subr.mxu0 0.0
    %1410 = vmatpush2.xpose.msra.mxu0 0.0
    %1411 = vmatprep.subr.mxu0 0.0
    %1412 = vmatpush2.xpose.msra.mxu0 0.0
    %1413 = vmatprep.subr.mxu0 0.0
    %1414 = vmatpush2.xpose.msra.mxu0 0.0
    %1415 = vmatprep.subr.mxu0 0.0
    %1416 = vmatpush2.xpose.msra.mxu0 0.0
    %1417 = vmatprep.subr.mxu0 0.0
    %1418 = vmatpush2.xpose.msra.mxu0 0.0
    %1419 = vmatprep.subr.mxu0 0.0
    %1420 = vmatpush2.xpose.msra.mxu0 0.0
    %1421 = vmatprep.subr.mxu0 0.0
    %1422 = vmatpush2.xpose.msra.mxu0 0.0
    %1423 = vmatprep.subr.mxu0 0.0
    %1424 = vmatpush2.xpose.msra.mxu0 0.0
    %1425 = vmatprep.subr.mxu0 0.0
    %1426 = vmatpush2.xpose.msra.mxu0 0.0
    %1427 = vmatprep.mubr.f32.mxu0 0.0
    %1428 = vmatmul.mubr.f32.gmra.mxu0 %v1358
    %v1429 = vpop.f32.mrf.mxu0
    %v1430 = vadd.f32 %v1355, %v1429
    %v1431 = vpop.f32.mrf.mxu0
    %1432 = vdwg.mxu0
    %v1434 = vsel %vm1356, %v703, 0
    %v1437 = vsel %vm1356, %v991, 0
    %1439 = vmatprep.subr.mxu0 0.0
    %1440 = vmatpush1.xpose.msra.mxu0 0.0
    %1441 = vmatprep.subr.mxu0 0.0
    %1442 = vmatpush1.xpose.msra.mxu0 0.0
    %1443 = vmatprep.subr.mxu0 0.0
    %1444 = vmatpush1.xpose.msra.mxu0 0.0
    %1445 = vmatprep.subr.mxu0 0.0
    %1446 = vmatpush1.xpose.msra.mxu0 0.0
    %1447 = vmatprep.subr.mxu0 0.0
    %1448 = vmatpush1.xpose.msra.mxu0 0.0
    %1449 = vmatprep.subr.mxu0 0.0
    %1450 = vmatpush1.xpose.msra.mxu0 0.0
    %1451 = vmatprep.subr.mxu0 0.0
    %1452 = vmatpush1.xpose.msra.mxu0 0.0
    %1453 = vmatprep.subr.mxu0 0.0
    %1454 = vmatpush1.xpose.msra.mxu0 0.0
    %1455 = vmatprep.subr.mxu0 0.0
    %1456 = vmatpush1.xpose.msra.mxu0 0.0
    %1457 = vmatprep.subr.mxu0 0.0
    %1458 = vmatpush1.xpose.msra.mxu0 0.0
    %1459 = vmatprep.subr.mxu0 0.0
    %1460 = vmatpush1.xpose.msra.mxu0 0.0
    %1461 = vmatprep.subr.mxu0 0.0
    %1462 = vmatpush1.xpose.msra.mxu0 0.0
    %1463 = vmatprep.subr.mxu0 0.0
    %1464 = vmatpush1.xpose.msra.mxu0 0.0
    %1465 = vmatprep.subr.mxu0 0.0
    %1466 = vmatpush1.xpose.msra.mxu0 0.0
    %1467 = vmatprep.subr.mxu0 0.0
    %1468 = vmatpush1.xpose.msra.mxu0 0.0
    %1469 = vmatprep.subr.mxu0 0.0
    %1470 = vmatpush1.xpose.msra.mxu0 %v1437
    %1471 = vmatprep.subr.mxu0 0.0
    %1472 = vmatpush2.xpose.msra.mxu0 0.0
    %1473 = vmatprep.subr.mxu0 0.0
    %1474 = vmatpush2.xpose.msra.mxu0 0.0
    %1475 = vmatprep.subr.mxu0 0.0
    %1476 = vmatpush2.xpose.msra.mxu0 0.0
    %1477 = vmatprep.subr.mxu0 0.0
    %1478 = vmatpush2.xpose.msra.mxu0 0.0
    %1479 = vmatprep.subr.mxu0 0.0
    %1480 = vmatpush2.xpose.msra.mxu0 0.0
    %1481 = vmatprep.subr.mxu0 0.0
    %1482 = vmatpush2.xpose.msra.mxu0 0.0
    %1483 = vmatprep.subr.mxu0 0.0
    %1484 = vmatpush2.xpose.msra.mxu0 0.0
    %1485 = vmatprep.subr.mxu0 0.0
    %1486 = vmatpush2.xpose.msra.mxu0 0.0
    %1487 = vmatprep.subr.mxu0 0.0
    %1488 = vmatpush2.xpose.msra.mxu0 0.0
    %1489 = vmatprep.subr.mxu0 0.0
    %1490 = vmatpush2.xpose.msra.mxu0 0.0
    %1491 = vmatprep.subr.mxu0 0.0
    %1492 = vmatpush2.xpose.msra.mxu0 0.0
    %1493 = vmatprep.subr.mxu0 0.0
    %1494 = vmatpush2.xpose.msra.mxu0 0.0
    %1495 = vmatprep.subr.mxu0 0.0
    %1496 = vmatpush2.xpose.msra.mxu0 0.0
    %1497 = vmatprep.subr.mxu0 0.0
    %1498 = vmatpush2.xpose.msra.mxu0 0.0
    %1499 = vmatprep.subr.mxu0 0.0
    %1500 = vmatpush2.xpose.msra.mxu0 0.0
    %1501 = vmatprep.subr.mxu0 0.0
    %1502 = vmatpush2.xpose.msra.mxu0 0.0
    %1503 = vmatprep.mubr.f32.mxu0 0.0
    %1504 = vmatmul.mubr.f32.gmra.mxu0 %v1434
    %v1505 = vpop.f32.mrf.mxu0
    %v1506 = vadd.f32 %v1355, %v1505
    %v1507 = vpop.f32.mrf.mxu0
    %1508 = vdwg.mxu0
    %v1510 = vsel %vm1356, %v704, 0
    %v1513 = vsel %vm1356, %v992, 0
    %1515 = vmatprep.subr.mxu0 0.0
    %1516 = vmatpush1.xpose.msra.mxu0 0.0
    %1517 = vmatprep.subr.mxu0 0.0
    %1518 = vmatpush1.xpose.msra.mxu0 0.0
    %1519 = vmatprep.subr.mxu0 0.0
    %1520 = vmatpush1.xpose.msra.mxu0 0.0
    %1521 = vmatprep.subr.mxu0 0.0
    %1522 = vmatpush1.xpose.msra.mxu0 0.0
    %1523 = vmatprep.subr.mxu0 0.0
    %1524 = vmatpush1.xpose.msra.mxu0 0.0
    %1525 = vmatprep.subr.mxu0 0.0
    %1526 = vmatpush1.xpose.msra.mxu0 0.0
    %1527 = vmatprep.subr.mxu0 0.0
    %1528 = vmatpush1.xpose.msra.mxu0 0.0
    %1529 = vmatprep.subr.mxu0 0.0
    %1530 = vmatpush1.xpose.msra.mxu0 0.0
    %1531 = vmatprep.subr.mxu0 0.0
    %1532 = vmatpush1.xpose.msra.mxu0 0.0
    %1533 = vmatprep.subr.mxu0 0.0
    %1534 = vmatpush1.xpose.msra.mxu0 0.0
    %1535 = vmatprep.subr.mxu0 0.0
    %1536 = vmatpush1.xpose.msra.mxu0 0.0
    %1537 = vmatprep.subr.mxu0 0.0
    %1538 = vmatpush1.xpose.msra.mxu0 0.0
    %1539 = vmatprep.subr.mxu0 0.0
    %1540 = vmatpush1.xpose.msra.mxu0 0.0
    %1541 = vmatprep.subr.mxu0 0.0
    %1542 = vmatpush1.xpose.msra.mxu0 0.0
    %1543 = vmatprep.subr.mxu0 0.0
    %1544 = vmatpush1.xpose.msra.mxu0 0.0
    %1545 = vmatprep.subr.mxu0 0.0
    %1546 = vmatpush1.xpose.msra.mxu0 %v1513
    %1547 = vmatprep.subr.mxu0 0.0
    %1548 = vmatpush2.xpose.msra.mxu0 0.0
    %1549 = vmatprep.subr.mxu0 0.0
    %1550 = vmatpush2.xpose.msra.mxu0 0.0
    %1551 = vmatprep.subr.mxu0 0.0
    %1552 = vmatpush2.xpose.msra.mxu0 0.0
    %1553 = vmatprep.subr.mxu0 0.0
    %1554 = vmatpush2.xpose.msra.mxu0 0.0
    %1555 = vmatprep.subr.mxu0 0.0
    %1556 = vmatpush2.xpose.msra.mxu0 0.0
    %1557 = vmatprep.subr.mxu0 0.0
    %1558 = vmatpush2.xpose.msra.mxu0 0.0
    %1559 = vmatprep.subr.mxu0 0.0
    %1560 = vmatpush2.xpose.msra.mxu0 0.0
    %1561 = vmatprep.subr.mxu0 0.0
    %1562 = vmatpush2.xpose.msra.mxu0 0.0
    %1563 = vmatprep.subr.mxu0 0.0
    %1564 = vmatpush2.xpose.msra.mxu0 0.0
    %1565 = vmatprep.subr.mxu0 0.0
    %1566 = vmatpush2.xpose.msra.mxu0 0.0
    %1567 = vmatprep.subr.mxu0 0.0
    %1568 = vmatpush2.xpose.msra.mxu0 0.0
    %1569 = vmatprep.subr.mxu0 0.0
    %1570 = vmatpush2.xpose.msra.mxu0 0.0
    %1571 = vmatprep.subr.mxu0 0.0
    %1572 = vmatpush2.xpose.msra.mxu0 0.0
    %1573 = vmatprep.subr.mxu0 0.0
    %1574 = vmatpush2.xpose.msra.mxu0 0.0
    %1575 = vmatprep.subr.mxu0 0.0
    %1576 = vmatpush2.xpose.msra.mxu0 0.0
    %1577 = vmatprep.subr.mxu0 0.0
    %1578 = vmatpush2.xpose.msra.mxu0 0.0
    %1579 = vmatprep.mubr.f32.mxu0 0.0
    %1580 = vmatmul.mubr.f32.gmra.mxu0 %v1510
    %v1581 = vpop.f32.mrf.mxu0
    %v1582 = vadd.f32 %v1355, %v1581
    %v1583 = vpop.f32.mrf.mxu0
    %1584 = vdwg.mxu0
    %v1586 = vsel %vm1356, %v705, 0
    %v1589 = vsel %vm1356, %v993, 0
    %1591 = vmatprep.subr.mxu0 0.0
    %1592 = vmatpush1.xpose.msra.mxu0 0.0
    %1593 = vmatprep.subr.mxu0 0.0
    %1594 = vmatpush1.xpose.msra.mxu0 0.0
    %1595 = vmatprep.subr.mxu0 0.0
    %1596 = vmatpush1.xpose.msra.mxu0 0.0
    %1597 = vmatprep.subr.mxu0 0.0
    %1598 = vmatpush1.xpose.msra.mxu0 0.0
    %1599 = vmatprep.subr.mxu0 0.0
    %1600 = vmatpush1.xpose.msra.mxu0 0.0
    %1601 = vmatprep.subr.mxu0 0.0
    %1602 = vmatpush1.xpose.msra.mxu0 0.0
    %1603 = vmatprep.subr.mxu0 0.0
    %1604 = vmatpush1.xpose.msra.mxu0 0.0
    %1605 = vmatprep.subr.mxu0 0.0
    %1606 = vmatpush1.xpose.msra.mxu0 0.0
    %1607 = vmatprep.subr.mxu0 0.0
    %1608 = vmatpush1.xpose.msra.mxu0 0.0
    %1609 = vmatprep.subr.mxu0 0.0
    %1610 = vmatpush1.xpose.msra.mxu0 0.0
    %1611 = vmatprep.subr.mxu0 0.0
    %1612 = vmatpush1.xpose.msra.mxu0 0.0
    %1613 = vmatprep.subr.mxu0 0.0
    %1614 = vmatpush1.xpose.msra.mxu0 0.0
    %1615 = vmatprep.subr.mxu0 0.0
    %1616 = vmatpush1.xpose.msra.mxu0 0.0
    %1617 = vmatprep.subr.mxu0 0.0
    %1618 = vmatpush1.xpose.msra.mxu0 0.0
    %1619 = vmatprep.subr.mxu0 0.0
    %1620 = vmatpush1.xpose.msra.mxu0 0.0
    %1621 = vmatprep.subr.mxu0 0.0
    %1622 = vmatpush1.xpose.msra.mxu0 %v1589
    %1623 = vmatprep.subr.mxu0 0.0
    %1624 = vmatpush2.xpose.msra.mxu0 0.0
    %1625 = vmatprep.subr.mxu0 0.0
    %1626 = vmatpush2.xpose.msra.mxu0 0.0
    %1627 = vmatprep.subr.mxu0 0.0
    %1628 = vmatpush2.xpose.msra.mxu0 0.0
    %1629 = vmatprep.subr.mxu0 0.0
    %1630 = vmatpush2.xpose.msra.mxu0 0.0
    %1631 = vmatprep.subr.mxu0 0.0
    %1632 = vmatpush2.xpose.msra.mxu0 0.0
    %1633 = vmatprep.subr.mxu0 0.0
    %1634 = vmatpush2.xpose.msra.mxu0 0.0
    %1635 = vmatprep.subr.mxu0 0.0
    %1636 = vmatpush2.xpose.msra.mxu0 0.0
    %1637 = vmatprep.subr.mxu0 0.0
    %1638 = vmatpush2.xpose.msra.mxu0 0.0
    %1639 = vmatprep.subr.mxu0 0.0
    %1640 = vmatpush2.xpose.msra.mxu0 0.0
    %1641 = vmatprep.subr.mxu0 0.0
    %1642 = vmatpush2.xpose.msra.mxu0 0.0
    %1643 = vmatprep.subr.mxu0 0.0
    %1644 = vmatpush2.xpose.msra.mxu0 0.0
    %1645 = vmatprep.subr.mxu0 0.0
    %1646 = vmatpush2.xpose.msra.mxu0 0.0
    %1647 = vmatprep.subr.mxu0 0.0
    %1648 = vmatpush2.xpose.msra.mxu0 0.0
    %1649 = vmatprep.subr.mxu0 0.0
    %1650 = vmatpush2.xpose.msra.mxu0 0.0
    %1651 = vmatprep.subr.mxu0 0.0
    %1652 = vmatpush2.xpose.msra.mxu0 0.0
    %1653 = vmatprep.subr.mxu0 0.0
    %1654 = vmatpush2.xpose.msra.mxu0 0.0
    %1655 = vmatprep.mubr.f32.mxu0 0.0
    %1656 = vmatmul.mubr.f32.gmra.mxu0 %v1586
    %v1657 = vpop.f32.mrf.mxu0
    %v1658 = vadd.f32 %v1355, %v1657
    %v1659 = vpop.f32.mrf.mxu0
    %1660 = vdwg.mxu0
    %v1662 = vsel %vm1356, %v770, 0
    %v1665 = vsel %vm1356, %v1058, 0
    %1667 = vmatprep.subr.mxu0 0.0
    %1668 = vmatpush1.xpose.msra.mxu0 0.0
    %1669 = vmatprep.subr.mxu0 0.0
    %1670 = vmatpush1.xpose.msra.mxu0 0.0
    %1671 = vmatprep.subr.mxu0 0.0
    %1672 = vmatpush1.xpose.msra.mxu0 0.0
    %1673 = vmatprep.subr.mxu0 0.0
    %1674 = vmatpush1.xpose.msra.mxu0 0.0
    %1675 = vmatprep.subr.mxu0 0.0
    %1676 = vmatpush1.xpose.msra.mxu0 0.0
    %1677 = vmatprep.subr.mxu0 0.0
    %1678 = vmatpush1.xpose.msra.mxu0 0.0
    %1679 = vmatprep.subr.mxu0 0.0
    %1680 = vmatpush1.xpose.msra.mxu0 0.0
    %1681 = vmatprep.subr.mxu0 0.0
    %1682 = vmatpush1.xpose.msra.mxu0 0.0
    %1683 = vmatprep.subr.mxu0 0.0
    %1684 = vmatpush1.xpose.msra.mxu0 0.0
    %1685 = vmatprep.subr.mxu0 0.0
    %1686 = vmatpush1.xpose.msra.mxu0 0.0
    %1687 = vmatprep.subr.mxu0 0.0
    %1688 = vmatpush1.xpose.msra.mxu0 0.0
    %1689 = vmatprep.subr.mxu0 0.0
    %1690 = vmatpush1.xpose.msra.mxu0 0.0
    %1691 = vmatprep.subr.mxu0 0.0
    %1692 = vmatpush1.xpose.msra.mxu0 0.0
    %1693 = vmatprep.subr.mxu0 0.0
    %1694 = vmatpush1.xpose.msra.mxu0 0.0
    %1695 = vmatprep.subr.mxu0 0.0
    %1696 = vmatpush1.xpose.msra.mxu0 0.0
    %1697 = vmatprep.subr.mxu0 0.0
    %1698 = vmatpush1.xpose.msra.mxu0 %v1665
    %1699 = vmatprep.subr.mxu0 0.0
    %1700 = vmatpush2.xpose.msra.mxu0 0.0
    %1701 = vmatprep.subr.mxu0 0.0
    %1702 = vmatpush2.xpose.msra.mxu0 0.0
    %1703 = vmatprep.subr.mxu0 0.0
    %1704 = vmatpush2.xpose.msra.mxu0 0.0
    %1705 = vmatprep.subr.mxu0 0.0
    %1706 = vmatpush2.xpose.msra.mxu0 0.0
    %1707 = vmatprep.subr.mxu0 0.0
    %1708 = vmatpush2.xpose.msra.mxu0 0.0
    %1709 = vmatprep.subr.mxu0 0.0
    %1710 = vmatpush2.xpose.msra.mxu0 0.0
    %1711 = vmatprep.subr.mxu0 0.0
    %1712 = vmatpush2.xpose.msra.mxu0 0.0
    %1713 = vmatprep.subr.mxu0 0.0
    %1714 = vmatpush2.xpose.msra.mxu0 0.0
    %1715 = vmatprep.subr.mxu0 0.0
    %1716 = vmatpush2.xpose.msra.mxu0 0.0
    %1717 = vmatprep.subr.mxu0 0.0
    %1718 = vmatpush2.xpose.msra.mxu0 0.0
    %1719 = vmatprep.subr.mxu0 0.0
    %1720 = vmatpush2.xpose.msra.mxu0 0.0
    %1721 = vmatprep.subr.mxu0 0.0
    %1722 = vmatpush2.xpose.msra.mxu0 0.0
    %1723 = vmatprep.subr.mxu0 0.0
    %1724 = vmatpush2.xpose.msra.mxu0 0.0
    %1725 = vmatprep.subr.mxu0 0.0
    %1726 = vmatpush2.xpose.msra.mxu0 0.0
    %1727 = vmatprep.subr.mxu0 0.0
    %1728 = vmatpush2.xpose.msra.mxu0 0.0
    %1729 = vmatprep.subr.mxu0 0.0
    %1730 = vmatpush2.xpose.msra.mxu0 0.0
    %1731 = vmatprep.mubr.f32.mxu0 0.0
    %1732 = vmatmul.mubr.f32.gmra.mxu0 %v1662
    %v1733 = vpop.f32.mrf.mxu0
    %v1734 = vadd.f32 %v1355, %v1733
    %v1735 = vpop.f32.mrf.mxu0
    %1736 = vdwg.mxu0
    %v1738 = vsel %vm1356, %v771, 0
    %v1741 = vsel %vm1356, %v1059, 0
    %1743 = vmatprep.subr.mxu0 0.0
    %1744 = vmatpush1.xpose.msra.mxu0 0.0
    %1745 = vmatprep.subr.mxu0 0.0
    %1746 = vmatpush1.xpose.msra.mxu0 0.0
    %1747 = vmatprep.subr.mxu0 0.0
    %1748 = vmatpush1.xpose.msra.mxu0 0.0
    %1749 = vmatprep.subr.mxu0 0.0
    %1750 = vmatpush1.xpose.msra.mxu0 0.0
    %1751 = vmatprep.subr.mxu0 0.0
    %1752 = vmatpush1.xpose.msra.mxu0 0.0
    %1753 = vmatprep.subr.mxu0 0.0
    %1754 = vmatpush1.xpose.msra.mxu0 0.0
    %1755 = vmatprep.subr.mxu0 0.0
    %1756 = vmatpush1.xpose.msra.mxu0 0.0
    %1757 = vmatprep.subr.mxu0 0.0
    %1758 = vmatpush1.xpose.msra.mxu0 0.0
    %1759 = vmatprep.subr.mxu0 0.0
    %1760 = vmatpush1.xpose.msra.mxu0 0.0
    %1761 = vmatprep.subr.mxu0 0.0
    %1762 = vmatpush1.xpose.msra.mxu0 0.0
    %1763 = vmatprep.subr.mxu0 0.0
    %1764 = vmatpush1.xpose.msra.mxu0 0.0
    %1765 = vmatprep.subr.mxu0 0.0
    %1766 = vmatpush1.xpose.msra.mxu0 0.0
    %1767 = vmatprep.subr.mxu0 0.0
    %1768 = vmatpush1.xpose.msra.mxu0 0.0
    %1769 = vmatprep.subr.mxu0 0.0
    %1770 = vmatpush1.xpose.msra.mxu0 0.0
    %1771 = vmatprep.subr.mxu0 0.0
    %1772 = vmatpush1.xpose.msra.mxu0 0.0
    %1773 = vmatprep.subr.mxu0 0.0
    %1774 = vmatpush1.xpose.msra.mxu0 %v1741
    %1775 = vmatprep.subr.mxu0 0.0
    %1776 = vmatpush2.xpose.msra.mxu0 0.0
    %1777 = vmatprep.subr.mxu0 0.0
    %1778 = vmatpush2.xpose.msra.mxu0 0.0
    %1779 = vmatprep.subr.mxu0 0.0
    %1780 = vmatpush2.xpose.msra.mxu0 0.0
    %1781 = vmatprep.subr.mxu0 0.0
    %1782 = vmatpush2.xpose.msra.mxu0 0.0
    %1783 = vmatprep.subr.mxu0 0.0
    %1784 = vmatpush2.xpose.msra.mxu0 0.0
    %1785 = vmatprep.subr.mxu0 0.0
    %1786 = vmatpush2.xpose.msra.mxu0 0.0
    %1787 = vmatprep.subr.mxu0 0.0
    %1788 = vmatpush2.xpose.msra.mxu0 0.0
    %1789 = vmatprep.subr.mxu0 0.0
    %1790 = vmatpush2.xpose.msra.mxu0 0.0
    %1791 = vmatprep.subr.mxu0 0.0
    %1792 = vmatpush2.xpose.msra.mxu0 0.0
    %1793 = vmatprep.subr.mxu0 0.0
    %1794 = vmatpush2.xpose.msra.mxu0 0.0
    %1795 = vmatprep.subr.mxu0 0.0
    %1796 = vmatpush2.xpose.msra.mxu0 0.0
    %1797 = vmatprep.subr.mxu0 0.0
    %1798 = vmatpush2.xpose.msra.mxu0 0.0
    %1799 = vmatprep.subr.mxu0 0.0
    %1800 = vmatpush2.xpose.msra.mxu0 0.0
    %1801 = vmatprep.subr.mxu0 0.0
    %1802 = vmatpush2.xpose.msra.mxu0 0.0
    %1803 = vmatprep.subr.mxu0 0.0
    %1804 = vmatpush2.xpose.msra.mxu0 0.0
    %1805 = vmatprep.subr.mxu0 0.0
    %1806 = vmatpush2.xpose.msra.mxu0 0.0
    %1807 = vmatprep.mubr.f32.mxu0 0.0
    %1808 = vmatmul.mubr.f32.gmra.mxu0 %v1738
    %v1809 = vpop.f32.mrf.mxu0
    %v1810 = vadd.f32 %v1355, %v1809
    %v1811 = vpop.f32.mrf.mxu0
    %1812 = vdwg.mxu0
    %v1814 = vsel %vm1356, %v772, 0
    %v1817 = vsel %vm1356, %v1060, 0
    %1819 = vmatprep.subr.mxu0 0.0
    %1820 = vmatpush1.xpose.msra.mxu0 0.0
    %1821 = vmatprep.subr.mxu0 0.0
    %1822 = vmatpush1.xpose.msra.mxu0 0.0
    %1823 = vmatprep.subr.mxu0 0.0
    %1824 = vmatpush1.xpose.msra.mxu0 0.0
    %1825 = vmatprep.subr.mxu0 0.0
    %1826 = vmatpush1.xpose.msra.mxu0 0.0
    %1827 = vmatprep.subr.mxu0 0.0
    %1828 = vmatpush1.xpose.msra.mxu0 0.0
    %1829 = vmatprep.subr.mxu0 0.0
    %1830 = vmatpush1.xpose.msra.mxu0 0.0
    %1831 = vmatprep.subr.mxu0 0.0
    %1832 = vmatpush1.xpose.msra.mxu0 0.0
    %1833 = vmatprep.subr.mxu0 0.0
    %1834 = vmatpush1.xpose.msra.mxu0 0.0
    %1835 = vmatprep.subr.mxu0 0.0
    %1836 = vmatpush1.xpose.msra.mxu0 0.0
    %1837 = vmatprep.subr.mxu0 0.0
    %1838 = vmatpush1.xpose.msra.mxu0 0.0
    %1839 = vmatprep.subr.mxu0 0.0
    %1840 = vmatpush1.xpose.msra.mxu0 0.0
    %1841 = vmatprep.subr.mxu0 0.0
    %1842 = vmatpush1.xpose.msra.mxu0 0.0
    %1843 = vmatprep.subr.mxu0 0.0
    %1844 = vmatpush1.xpose.msra.mxu0 0.0
    %1845 = vmatprep.subr.mxu0 0.0
    %1846 = vmatpush1.xpose.msra.mxu0 0.0
    %1847 = vmatprep.subr.mxu0 0.0
    %1848 = vmatpush1.xpose.msra.mxu0 0.0
    %1849 = vmatprep.subr.mxu0 0.0
    %1850 = vmatpush1.xpose.msra.mxu0 %v1817
    %1851 = vmatprep.subr.mxu0 0.0
    %1852 = vmatpush2.xpose.msra.mxu0 0.0
    %1853 = vmatprep.subr.mxu0 0.0
    %1854 = vmatpush2.xpose.msra.mxu0 0.0
    %1855 = vmatprep.subr.mxu0 0.0
    %1856 = vmatpush2.xpose.msra.mxu0 0.0
    %1857 = vmatprep.subr.mxu0 0.0
    %1858 = vmatpush2.xpose.msra.mxu0 0.0
    %1859 = vmatprep.subr.mxu0 0.0
    %1860 = vmatpush2.xpose.msra.mxu0 0.0
    %1861 = vmatprep.subr.mxu0 0.0
    %1862 = vmatpush2.xpose.msra.mxu0 0.0
    %1863 = vmatprep.subr.mxu0 0.0
    %1864 = vmatpush2.xpose.msra.mxu0 0.0
    %1865 = vmatprep.subr.mxu0 0.0
    %1866 = vmatpush2.xpose.msra.mxu0 0.0
    %1867 = vmatprep.subr.mxu0 0.0
    %1868 = vmatpush2.xpose.msra.mxu0 0.0
    %1869 = vmatprep.subr.mxu0 0.0
    %1870 = vmatpush2.xpose.msra.mxu0 0.0
    %1871 = vmatprep.subr.mxu0 0.0
    %1872 = vmatpush2.xpose.msra.mxu0 0.0
    %1873 = vmatprep.subr.mxu0 0.0
    %1874 = vmatpush2.xpose.msra.mxu0 0.0
    %1875 = vmatprep.subr.mxu0 0.0
    %1876 = vmatpush2.xpose.msra.mxu0 0.0
    %1877 = vmatprep.subr.mxu0 0.0
    %1878 = vmatpush2.xpose.msra.mxu0 0.0
    %1879 = vmatprep.subr.mxu0 0.0
    %1880 = vmatpush2.xpose.msra.mxu0 0.0
    %1881 = vmatprep.subr.mxu0 0.0
    %1882 = vmatpush2.xpose.msra.mxu0 0.0
    %1883 = vmatprep.mubr.f32.mxu0 0.0
    %1884 = vmatmul.mubr.f32.gmra.mxu0 %v1814
    %v1885 = vpop.f32.mrf.mxu0
    %v1886 = vadd.f32 %v1355, %v1885
    %v1887 = vpop.f32.mrf.mxu0
    %1888 = vdwg.mxu0
    %v1890 = vsel %vm1356, %v773, 0
    %v1893 = vsel %vm1356, %v1061, 0
    %1895 = vmatprep.subr.mxu0 0.0
    %1896 = vmatpush1.xpose.msra.mxu0 0.0
    %1897 = vmatprep.subr.mxu0 0.0
    %1898 = vmatpush1.xpose.msra.mxu0 0.0
    %1899 = vmatprep.subr.mxu0 0.0
    %1900 = vmatpush1.xpose.msra.mxu0 0.0
    %1901 = vmatprep.subr.mxu0 0.0
    %1902 = vmatpush1.xpose.msra.mxu0 0.0
    %1903 = vmatprep.subr.mxu0 0.0
    %1904 = vmatpush1.xpose.msra.mxu0 0.0
    %1905 = vmatprep.subr.mxu0 0.0
    %1906 = vmatpush1.xpose.msra.mxu0 0.0
    %1907 = vmatprep.subr.mxu0 0.0
    %1908 = vmatpush1.xpose.msra.mxu0 0.0
    %1909 = vmatprep.subr.mxu0 0.0
    %1910 = vmatpush1.xpose.msra.mxu0 0.0
    %1911 = vmatprep.subr.mxu0 0.0
    %1912 = vmatpush1.xpose.msra.mxu0 0.0
    %1913 = vmatprep.subr.mxu0 0.0
    %1914 = vmatpush1.xpose.msra.mxu0 0.0
    %1915 = vmatprep.subr.mxu0 0.0
    %1916 = vmatpush1.xpose.msra.mxu0 0.0
    %1917 = vmatprep.subr.mxu0 0.0
    %1918 = vmatpush1.xpose.msra.mxu0 0.0
    %1919 = vmatprep.subr.mxu0 0.0
    %1920 = vmatpush1.xpose.msra.mxu0 0.0
    %1921 = vmatprep.subr.mxu0 0.0
    %1922 = vmatpush1.xpose.msra.mxu0 0.0
    %1923 = vmatprep.subr.mxu0 0.0
    %1924 = vmatpush1.xpose.msra.mxu0 0.0
    %1925 = vmatprep.subr.mxu0 0.0
    %1926 = vmatpush1.xpose.msra.mxu0 %v1893
    %1927 = vmatprep.subr.mxu0 0.0
    %1928 = vmatpush2.xpose.msra.mxu0 0.0
    %1929 = vmatprep.subr.mxu0 0.0
    %1930 = vmatpush2.xpose.msra.mxu0 0.0
    %1931 = vmatprep.subr.mxu0 0.0
    %1932 = vmatpush2.xpose.msra.mxu0 0.0
    %1933 = vmatprep.subr.mxu0 0.0
    %1934 = vmatpush2.xpose.msra.mxu0 0.0
    %1935 = vmatprep.subr.mxu0 0.0
    %1936 = vmatpush2.xpose.msra.mxu0 0.0
    %1937 = vmatprep.subr.mxu0 0.0
    %1938 = vmatpush2.xpose.msra.mxu0 0.0
    %1939 = vmatprep.subr.mxu0 0.0
    %1940 = vmatpush2.xpose.msra.mxu0 0.0
    %1941 = vmatprep.subr.mxu0 0.0
    %1942 = vmatpush2.xpose.msra.mxu0 0.0
    %1943 = vmatprep.subr.mxu0 0.0
    %1944 = vmatpush2.xpose.msra.mxu0 0.0
    %1945 = vmatprep.subr.mxu0 0.0
    %1946 = vmatpush2.xpose.msra.mxu0 0.0
    %1947 = vmatprep.subr.mxu0 0.0
    %1948 = vmatpush2.xpose.msra.mxu0 0.0
    %1949 = vmatprep.subr.mxu0 0.0
    %1950 = vmatpush2.xpose.msra.mxu0 0.0
    %1951 = vmatprep.subr.mxu0 0.0
    %1952 = vmatpush2.xpose.msra.mxu0 0.0
    %1953 = vmatprep.subr.mxu0 0.0
    %1954 = vmatpush2.xpose.msra.mxu0 0.0
    %1955 = vmatprep.subr.mxu0 0.0
    %1956 = vmatpush2.xpose.msra.mxu0 0.0
    %1957 = vmatprep.subr.mxu0 0.0
    %1958 = vmatpush2.xpose.msra.mxu0 0.0
    %1959 = vmatprep.mubr.f32.mxu0 0.0
    %1960 = vmatmul.mubr.f32.gmra.mxu0 %v1890
    %v1961 = vpop.f32.mrf.mxu0
    %v1962 = vadd.f32 %v1355, %v1961
    %v1963 = vpop.f32.mrf.mxu0
    %1964 = vdwg.mxu0
    %vm1965 = vcmask 64512
    %v1966 = vsel %vm1965, %v1430, -inf
    %1967 = vmax.xlane.f32.xlu0 %v1966
    %v1968 = vpop.xlane.xlu0 %1967
    %v1969 = vsel %vm1965, %v1506, -inf
    %1970 = vmax.xlane.f32.xlu0 %v1969
    %v1971 = vpop.xlane.xlu0 %1970
    %v1972 = vsel %vm1965, %v1582, -inf
    %1973 = vmax.xlane.f32.xlu0 %v1972
    %v1974 = vpop.xlane.xlu0 %1973
    %v1975 = vsel %vm1965, %v1658, -inf
    %1976 = vmax.xlane.f32.xlu0 %v1975
    %v1977 = vpop.xlane.xlu0 %1976
    %v1978 = vsel %vm1965, %v1734, -inf
    %1979 = vmax.xlane.f32.xlu0 %v1978
    %v1980 = vpop.xlane.xlu0 %1979
    %v1981 = vsel %vm1965, %v1810, -inf
    %1982 = vmax.xlane.f32.xlu0 %v1981
    %v1983 = vpop.xlane.xlu0 %1982
    %v1984 = vsel %vm1965, %v1886, -inf
    %1985 = vmax.xlane.f32.xlu0 %v1984
    %v1986 = vpop.xlane.xlu0 %1985
    %v1987 = vsel %vm1965, %v1962, -inf
    %1988 = vmax.xlane.f32.xlu0 %v1987
    %v1989 = vpop.xlane.xlu0 %1988
    %v1990 = vsub.f32 %v1430, %v1968
    %v1991 = vsub.f32 %v1506, %v1971
    %v1992 = vsub.f32 %v1582, %v1974
    %v1993 = vsub.f32 %v1658, %v1977
    %v1994 = vsub.f32 %v1734, %v1980
    %v1995 = vsub.f32 %v1810, %v1983
    %v1996 = vsub.f32 %v1886, %v1986
    %v1997 = vsub.f32 %v1962, %v1989
    %v1998 = vmul.f32 %v1990, 1.442695
    %v1999 = vpow.pop %v1998
    %v2000 = vmul.f32 %v1991, 1.442695
    %v2001 = vpow.pop %v2000
    %v2002 = vmul.f32 %v1992, 1.442695
    %v2003 = vpow.pop %v2002
    %v2004 = vmul.f32 %v1993, 1.442695
    %v2005 = vpow.pop %v2004
    %v2006 = vmul.f32 %v1994, 1.442695
    %v2007 = vpow.pop %v2006
    %v2008 = vmul.f32 %v1995, 1.442695
    %v2009 = vpow.pop %v2008
    %v2010 = vmul.f32 %v1996, 1.442695
    %v2011 = vpow.pop %v2010
    %v2012 = vmul.f32 %v1997, 1.442695
    %v2013 = vpow.pop %v2012
    %v2014 = vsel %vm1965, %v1999, 0.0
    %2015 = vadd.xlane.f32.xlu0 %v2014
    %v2016 = vpop.xlane.xlu0 %2015
    %v2017 = vsel %vm1965, %v2001, 0.0
    %2018 = vadd.xlane.f32.xlu0 %v2017
    %v2019 = vpop.xlane.xlu0 %2018
    %v2020 = vsel %vm1965, %v2003, 0.0
    %2021 = vadd.xlane.f32.xlu0 %v2020
    %v2022 = vpop.xlane.xlu0 %2021
    %v2023 = vsel %vm1965, %v2005, 0.0
    %2024 = vadd.xlane.f32.xlu0 %v2023
    %v2025 = vpop.xlane.xlu0 %2024
    %v2026 = vsel %vm1965, %v2007, 0.0
    %2027 = vadd.xlane.f32.xlu0 %v2026
    %v2028 = vpop.xlane.xlu0 %2027
    %v2029 = vsel %vm1965, %v2009, 0.0
    %2030 = vadd.xlane.f32.xlu0 %v2029
    %v2031 = vpop.xlane.xlu0 %2030
    %v2032 = vsel %vm1965, %v2011, 0.0
    %2033 = vadd.xlane.f32.xlu0 %v2032
    %v2034 = vpop.xlane.xlu0 %2033
    %v2035 = vsel %vm1965, %v2013, 0.0
    %2036 = vadd.xlane.f32.xlu0 %v2035
    %v2037 = vpop.xlane.xlu0 %2036
    %v2038 = vrcp.pop %v2016
    %v2039 = vrcp.pop %v2019
    %v2040 = vrcp.pop %v2022
    %v2041 = vrcp.pop %v2025
    %v2042 = vrcp.pop %v2028
    %v2043 = vrcp.pop %v2031
    %v2044 = vrcp.pop %v2034
    %v2045 = vrcp.pop %v2037
    %v2046 = vmul.f32 %v1999, %v2038
    %v2047 = vmul.f32 %v2001, %v2039
    %v2048 = vmul.f32 %v2003, %v2040
    %v2049 = vmul.f32 %v2005, %v2041
    %v2050 = vmul.f32 %v2007, %v2042
    %v2051 = vmul.f32 %v2009, %v2043
    %v2052 = vmul.f32 %v2011, %v2044
    %v2053 = vmul.f32 %v2013, %v2045
    %v2055 = vsel %vm1965, %v2046, 0
    %2057 = vmatprep.subr.mxu0 0.0
    %2058 = vmatpush1.msra.mxu0 0.0
    %2059 = vmatprep.subr.mxu0 0.0
    %2060 = vmatpush1.msra.mxu0 0.0
    %2061 = vmatprep.subr.mxu0 0.0
    %2062 = vmatpush1.msra.mxu0 0.0
    %2063 = vmatprep.subr.mxu0 0.0
    %2064 = vmatpush1.msra.mxu0 0.0
    %2065 = vmatprep.subr.mxu0 0.0
    %2066 = vmatpush1.msra.mxu0 0.0
    %2067 = vmatprep.subr.mxu0 0.0
    %2068 = vmatpush1.msra.mxu0 0.0
    %2069 = vmatprep.subr.mxu0 0.0
    %2070 = vmatpush1.msra.mxu0 0.0
    %2071 = vmatprep.subr.mxu0 0.0
    %2072 = vmatpush1.msra.mxu0 0.0
    %2073 = vmatprep.subr.mxu0 0.0
    %2074 = vmatpush1.msra.mxu0 0.0
    %2075 = vmatprep.subr.mxu0 0.0
    %2076 = vmatpush1.msra.mxu0 0.0
    %2077 = vmatprep.subr.mxu0 0.0
    %2078 = vmatpush1.msra.mxu0 0.0
    %2079 = vmatprep.subr.mxu0 0.0
    %2080 = vmatpush1.msra.mxu0 0.0
    %2081 = vmatprep.subr.mxu0 0.0
    %2082 = vmatpush1.msra.mxu0 0.0
    %2083 = vmatprep.subr.mxu0 0.0
    %2084 = vmatpush1.msra.mxu0 0.0
    %2085 = vmatprep.subr.mxu0 0.0
    %2086 = vmatpush1.msra.mxu0 0.0
    %2087 = vmatprep.subr.mxu0 0.0
    %2088 = vmatpush1.msra.mxu0 %v1278
    %2089 = vmatprep.subr.mxu0 0.0
    %2090 = vmatpush2.msra.mxu0 0.0
    %2091 = vmatprep.subr.mxu0 0.0
    %2092 = vmatpush2.msra.mxu0 0.0
    %2093 = vmatprep.subr.mxu0 0.0
    %2094 = vmatpush2.msra.mxu0 0.0
    %2095 = vmatprep.subr.mxu0 0.0
    %2096 = vmatpush2.msra.mxu0 0.0
    %2097 = vmatprep.subr.mxu0 0.0
    %2098 = vmatpush2.msra.mxu0 0.0
    %2099 = vmatprep.subr.mxu0 0.0
    %2100 = vmatpush2.msra.mxu0 0.0
    %2101 = vmatprep.subr.mxu0 0.0
    %2102 = vmatpush2.msra.mxu0 0.0
    %2103 = vmatprep.subr.mxu0 0.0
    %2104 = vmatpush2.msra.mxu0 0.0
    %2105 = vmatprep.subr.mxu0 0.0
    %2106 = vmatpush2.msra.mxu0 0.0
    %2107 = vmatprep.subr.mxu0 0.0
    %2108 = vmatpush2.msra.mxu0 0.0
    %2109 = vmatprep.subr.mxu0 0.0
    %2110 = vmatpush2.msra.mxu0 0.0
    %2111 = vmatprep.subr.mxu0 0.0
    %2112 = vmatpush2.msra.mxu0 0.0
    %2113 = vmatprep.subr.mxu0 0.0
    %2114 = vmatpush2.msra.mxu0 0.0
    %2115 = vmatprep.subr.mxu0 0.0
    %2116 = vmatpush2.msra.mxu0 0.0
    %2117 = vmatprep.subr.mxu0 0.0
    %2118 = vmatpush2.msra.mxu0 0.0
    %2119 = vmatprep.subr.mxu0 0.0
    %2120 = vmatpush2.msra.mxu0 0.0
    %2121 = vmatprep.mubr.f32.mxu0 0.0
    %2122 = vmatmul.mubr.f32.gmra.mxu0 %v2055
    %v2123 = vpop.f32.mrf.mxu0
    %v2124 = vadd.f32 0.0, %v2123
    %v2125 = vpop.f32.mrf.mxu0
    %2126 = vdwg.mxu0
    %v2128 = vsel %vm1965, %v2047, 0
    %2130 = vmatprep.subr.mxu0 0.0
    %2131 = vmatpush1.msra.mxu0 0.0
    %2132 = vmatprep.subr.mxu0 0.0
    %2133 = vmatpush1.msra.mxu0 0.0
    %2134 = vmatprep.subr.mxu0 0.0
    %2135 = vmatpush1.msra.mxu0 0.0
    %2136 = vmatprep.subr.mxu0 0.0
    %2137 = vmatpush1.msra.mxu0 0.0
    %2138 = vmatprep.subr.mxu0 0.0
    %2139 = vmatpush1.msra.mxu0 0.0
    %2140 = vmatprep.subr.mxu0 0.0
    %2141 = vmatpush1.msra.mxu0 0.0
    %2142 = vmatprep.subr.mxu0 0.0
    %2143 = vmatpush1.msra.mxu0 0.0
    %2144 = vmatprep.subr.mxu0 0.0
    %2145 = vmatpush1.msra.mxu0 0.0
    %2146 = vmatprep.subr.mxu0 0.0
    %2147 = vmatpush1.msra.mxu0 0.0
    %2148 = vmatprep.subr.mxu0 0.0
    %2149 = vmatpush1.msra.mxu0 0.0
    %2150 = vmatprep.subr.mxu0 0.0
    %2151 = vmatpush1.msra.mxu0 0.0
    %2152 = vmatprep.subr.mxu0 0.0
    %2153 = vmatpush1.msra.mxu0 0.0
    %2154 = vmatprep.subr.mxu0 0.0
    %2155 = vmatpush1.msra.mxu0 0.0
    %2156 = vmatprep.subr.mxu0 0.0
    %2157 = vmatpush1.msra.mxu0 0.0
    %2158 = vmatprep.subr.mxu0 0.0
    %2159 = vmatpush1.msra.mxu0 0.0
    %2160 = vmatprep.subr.mxu0 0.0
    %2161 = vmatpush1.msra.mxu0 %v1279
    %2162 = vmatprep.subr.mxu0 0.0
    %2163 = vmatpush2.msra.mxu0 0.0
    %2164 = vmatprep.subr.mxu0 0.0
    %2165 = vmatpush2.msra.mxu0 0.0
    %2166 = vmatprep.subr.mxu0 0.0
    %2167 = vmatpush2.msra.mxu0 0.0
    %2168 = vmatprep.subr.mxu0 0.0
    %2169 = vmatpush2.msra.mxu0 0.0
    %2170 = vmatprep.subr.mxu0 0.0
    %2171 = vmatpush2.msra.mxu0 0.0
    %2172 = vmatprep.subr.mxu0 0.0
    %2173 = vmatpush2.msra.mxu0 0.0
    %2174 = vmatprep.subr.mxu0 0.0
    %2175 = vmatpush2.msra.mxu0 0.0
    %2176 = vmatprep.subr.mxu0 0.0
    %2177 = vmatpush2.msra.mxu0 0.0
    %2178 = vmatprep.subr.mxu0 0.0
    %2179 = vmatpush2.msra.mxu0 0.0
    %2180 = vmatprep.subr.mxu0 0.0
    %2181 = vmatpush2.msra.mxu0 0.0
    %2182 = vmatprep.subr.mxu0 0.0
    %2183 = vmatpush2.msra.mxu0 0.0
    %2184 = vmatprep.subr.mxu0 0.0
    %2185 = vmatpush2.msra.mxu0 0.0
    %2186 = vmatprep.subr.mxu0 0.0
    %2187 = vmatpush2.msra.mxu0 0.0
    %2188 = vmatprep.subr.mxu0 0.0
    %2189 = vmatpush2.msra.mxu0 0.0
    %2190 = vmatprep.subr.mxu0 0.0
    %2191 = vmatpush2.msra.mxu0 0.0
    %2192 = vmatprep.subr.mxu0 0.0
    %2193 = vmatpush2.msra.mxu0 0.0
    %2194 = vmatprep.mubr.f32.mxu0 0.0
    %2195 = vmatmul.mubr.f32.gmra.mxu0 %v2128
    %v2196 = vpop.f32.mrf.mxu0
    %v2197 = vadd.f32 0.0, %v2196
    %v2198 = vpop.f32.mrf.mxu0
    %2199 = vdwg.mxu0
    %v2201 = vsel %vm1965, %v2048, 0
    %2203 = vmatprep.subr.mxu0 0.0
    %2204 = vmatpush1.msra.mxu0 0.0
    %2205 = vmatprep.subr.mxu0 0.0
    %2206 = vmatpush1.msra.mxu0 0.0
    %2207 = vmatprep.subr.mxu0 0.0
    %2208 = vmatpush1.msra.mxu0 0.0
    %2209 = vmatprep.subr.mxu0 0.0
    %2210 = vmatpush1.msra.mxu0 0.0
    %2211 = vmatprep.subr.mxu0 0.0
    %2212 = vmatpush1.msra.mxu0 0.0
    %2213 = vmatprep.subr.mxu0 0.0
    %2214 = vmatpush1.msra.mxu0 0.0
    %2215 = vmatprep.subr.mxu0 0.0
    %2216 = vmatpush1.msra.mxu0 0.0
    %2217 = vmatprep.subr.mxu0 0.0
    %2218 = vmatpush1.msra.mxu0 0.0
    %2219 = vmatprep.subr.mxu0 0.0
    %2220 = vmatpush1.msra.mxu0 0.0
    %2221 = vmatprep.subr.mxu0 0.0
    %2222 = vmatpush1.msra.mxu0 0.0
    %2223 = vmatprep.subr.mxu0 0.0
    %2224 = vmatpush1.msra.mxu0 0.0
    %2225 = vmatprep.subr.mxu0 0.0
    %2226 = vmatpush1.msra.mxu0 0.0
    %2227 = vmatprep.subr.mxu0 0.0
    %2228 = vmatpush1.msra.mxu0 0.0
    %2229 = vmatprep.subr.mxu0 0.0
    %2230 = vmatpush1.msra.mxu0 0.0
    %2231 = vmatprep.subr.mxu0 0.0
    %2232 = vmatpush1.msra.mxu0 0.0
    %2233 = vmatprep.subr.mxu0 0.0
    %2234 = vmatpush1.msra.mxu0 %v1280
    %2235 = vmatprep.subr.mxu0 0.0
    %2236 = vmatpush2.msra.mxu0 0.0
    %2237 = vmatprep.subr.mxu0 0.0
    %2238 = vmatpush2.msra.mxu0 0.0
    %2239 = vmatprep.subr.mxu0 0.0
    %2240 = vmatpush2.msra.mxu0 0.0
    %2241 = vmatprep.subr.mxu0 0.0
    %2242 = vmatpush2.msra.mxu0 0.0
    %2243 = vmatprep.subr.mxu0 0.0
    %2244 = vmatpush2.msra.mxu0 0.0
    %2245 = vmatprep.subr.mxu0 0.0
    %2246 = vmatpush2.msra.mxu0 0.0
    %2247 = vmatprep.subr.mxu0 0.0
    %2248 = vmatpush2.msra.mxu0 0.0
    %2249 = vmatprep.subr.mxu0 0.0
    %2250 = vmatpush2.msra.mxu0 0.0
    %2251 = vmatprep.subr.mxu0 0.0
    %2252 = vmatpush2.msra.mxu0 0.0
    %2253 = vmatprep.subr.mxu0 0.0
    %2254 = vmatpush2.msra.mxu0 0.0
    %2255 = vmatprep.subr.mxu0 0.0
    %2256 = vmatpush2.msra.mxu0 0.0
    %2257 = vmatprep.subr.mxu0 0.0
    %2258 = vmatpush2.msra.mxu0 0.0
    %2259 = vmatprep.subr.mxu0 0.0
    %2260 = vmatpush2.msra.mxu0 0.0
    %2261 = vmatprep.subr.mxu0 0.0
    %2262 = vmatpush2.msra.mxu0 0.0
    %2263 = vmatprep.subr.mxu0 0.0
    %2264 = vmatpush2.msra.mxu0 0.0
    %2265 = vmatprep.subr.mxu0 0.0
    %2266 = vmatpush2.msra.mxu0 0.0
    %2267 = vmatprep.mubr.f32.mxu0 0.0
    %2268 = vmatmul.mubr.f32.gmra.mxu0 %v2201
    %v2269 = vpop.f32.mrf.mxu0
    %v2270 = vadd.f32 0.0, %v2269
    %v2271 = vpop.f32.mrf.mxu0
    %2272 = vdwg.mxu0
    %v2274 = vsel %vm1965, %v2049, 0
    %2276 = vmatprep.subr.mxu0 0.0
    %2277 = vmatpush1.msra.mxu0 0.0
    %2278 = vmatprep.subr.mxu0 0.0
    %2279 = vmatpush1.msra.mxu0 0.0
    %2280 = vmatprep.subr.mxu0 0.0
    %2281 = vmatpush1.msra.mxu0 0.0
    %2282 = vmatprep.subr.mxu0 0.0
    %2283 = vmatpush1.msra.mxu0 0.0
    %2284 = vmatprep.subr.mxu0 0.0
    %2285 = vmatpush1.msra.mxu0 0.0
    %2286 = vmatprep.subr.mxu0 0.0
    %2287 = vmatpush1.msra.mxu0 0.0
    %2288 = vmatprep.subr.mxu0 0.0
    %2289 = vmatpush1.msra.mxu0 0.0
    %2290 = vmatprep.subr.mxu0 0.0
    %2291 = vmatpush1.msra.mxu0 0.0
    %2292 = vmatprep.subr.mxu0 0.0
    %2293 = vmatpush1.msra.mxu0 0.0
    %2294 = vmatprep.subr.mxu0 0.0
    %2295 = vmatpush1.msra.mxu0 0.0
    %2296 = vmatprep.subr.mxu0 0.0
    %2297 = vmatpush1.msra.mxu0 0.0
    %2298 = vmatprep.subr.mxu0 0.0
    %2299 = vmatpush1.msra.mxu0 0.0
    %2300 = vmatprep.subr.mxu0 0.0
    %2301 = vmatpush1.msra.mxu0 0.0
    %2302 = vmatprep.subr.mxu0 0.0
    %2303 = vmatpush1.msra.mxu0 0.0
    %2304 = vmatprep.subr.mxu0 0.0
    %2305 = vmatpush1.msra.mxu0 0.0
    %2306 = vmatprep.subr.mxu0 0.0
    %2307 = vmatpush1.msra.mxu0 %v1281
    %2308 = vmatprep.subr.mxu0 0.0
    %2309 = vmatpush2.msra.mxu0 0.0
    %2310 = vmatprep.subr.mxu0 0.0
    %2311 = vmatpush2.msra.mxu0 0.0
    %2312 = vmatprep.subr.mxu0 0.0
    %2313 = vmatpush2.msra.mxu0 0.0
    %2314 = vmatprep.subr.mxu0 0.0
    %2315 = vmatpush2.msra.mxu0 0.0
    %2316 = vmatprep.subr.mxu0 0.0
    %2317 = vmatpush2.msra.mxu0 0.0
    %2318 = vmatprep.subr.mxu0 0.0
    %2319 = vmatpush2.msra.mxu0 0.0
    %2320 = vmatprep.subr.mxu0 0.0
    %2321 = vmatpush2.msra.mxu0 0.0
    %2322 = vmatprep.subr.mxu0 0.0
    %2323 = vmatpush2.msra.mxu0 0.0
    %2324 = vmatprep.subr.mxu0 0.0
    %2325 = vmatpush2.msra.mxu0 0.0
    %2326 = vmatprep.subr.mxu0 0.0
    %2327 = vmatpush2.msra.mxu0 0.0
    %2328 = vmatprep.subr.mxu0 0.0
    %2329 = vmatpush2.msra.mxu0 0.0
    %2330 = vmatprep.subr.mxu0 0.0
    %2331 = vmatpush2.msra.mxu0 0.0
    %2332 = vmatprep.subr.mxu0 0.0
    %2333 = vmatpush2.msra.mxu0 0.0
    %2334 = vmatprep.subr.mxu0 0.0
    %2335 = vmatpush2.msra.mxu0 0.0
    %2336 = vmatprep.subr.mxu0 0.0
    %2337 = vmatpush2.msra.mxu0 0.0
    %2338 = vmatprep.subr.mxu0 0.0
    %2339 = vmatpush2.msra.mxu0 0.0
    %2340 = vmatprep.mubr.f32.mxu0 0.0
    %2341 = vmatmul.mubr.f32.gmra.mxu0 %v2274
    %v2342 = vpop.f32.mrf.mxu0
    %v2343 = vadd.f32 0.0, %v2342
    %v2344 = vpop.f32.mrf.mxu0
    %2345 = vdwg.mxu0
    %v2347 = vsel %vm1965, %v2050, 0
    %2349 = vmatprep.subr.mxu0 0.0
    %2350 = vmatpush1.msra.mxu0 0.0
    %2351 = vmatprep.subr.mxu0 0.0
    %2352 = vmatpush1.msra.mxu0 0.0
    %2353 = vmatprep.subr.mxu0 0.0
    %2354 = vmatpush1.msra.mxu0 0.0
    %2355 = vmatprep.subr.mxu0 0.0
    %2356 = vmatpush1.msra.mxu0 0.0
    %2357 = vmatprep.subr.mxu0 0.0
    %2358 = vmatpush1.msra.mxu0 0.0
    %2359 = vmatprep.subr.mxu0 0.0
    %2360 = vmatpush1.msra.mxu0 0.0
    %2361 = vmatprep.subr.mxu0 0.0
    %2362 = vmatpush1.msra.mxu0 0.0
    %2363 = vmatprep.subr.mxu0 0.0
    %2364 = vmatpush1.msra.mxu0 0.0
    %2365 = vmatprep.subr.mxu0 0.0
    %2366 = vmatpush1.msra.mxu0 0.0
    %2367 = vmatprep.subr.mxu0 0.0
    %2368 = vmatpush1.msra.mxu0 0.0
    %2369 = vmatprep.subr.mxu0 0.0
    %2370 = vmatpush1.msra.mxu0 0.0
    %2371 = vmatprep.subr.mxu0 0.0
    %2372 = vmatpush1.msra.mxu0 0.0
    %2373 = vmatprep.subr.mxu0 0.0
    %2374 = vmatpush1.msra.mxu0 0.0
    %2375 = vmatprep.subr.mxu0 0.0
    %2376 = vmatpush1.msra.mxu0 0.0
    %2377 = vmatprep.subr.mxu0 0.0
    %2378 = vmatpush1.msra.mxu0 0.0
    %2379 = vmatprep.subr.mxu0 0.0
    %2380 = vmatpush1.msra.mxu0 %v1346
    %2381 = vmatprep.subr.mxu0 0.0
    %2382 = vmatpush2.msra.mxu0 0.0
    %2383 = vmatprep.subr.mxu0 0.0
    %2384 = vmatpush2.msra.mxu0 0.0
    %2385 = vmatprep.subr.mxu0 0.0
    %2386 = vmatpush2.msra.mxu0 0.0
    %2387 = vmatprep.subr.mxu0 0.0
    %2388 = vmatpush2.msra.mxu0 0.0
    %2389 = vmatprep.subr.mxu0 0.0
    %2390 = vmatpush2.msra.mxu0 0.0
    %2391 = vmatprep.subr.mxu0 0.0
    %2392 = vmatpush2.msra.mxu0 0.0
    %2393 = vmatprep.subr.mxu0 0.0
    %2394 = vmatpush2.msra.mxu0 0.0
    %2395 = vmatprep.subr.mxu0 0.0
    %2396 = vmatpush2.msra.mxu0 0.0
    %2397 = vmatprep.subr.mxu0 0.0
    %2398 = vmatpush2.msra.mxu0 0.0
    %2399 = vmatprep.subr.mxu0 0.0
    %2400 = vmatpush2.msra.mxu0 0.0
    %2401 = vmatprep.subr.mxu0 0.0
    %2402 = vmatpush2.msra.mxu0 0.0
    %2403 = vmatprep.subr.mxu0 0.0
    %2404 = vmatpush2.msra.mxu0 0.0
    %2405 = vmatprep.subr.mxu0 0.0
    %2406 = vmatpush2.msra.mxu0 0.0
    %2407 = vmatprep.subr.mxu0 0.0
    %2408 = vmatpush2.msra.mxu0 0.0
    %2409 = vmatprep.subr.mxu0 0.0
    %2410 = vmatpush2.msra.mxu0 0.0
    %2411 = vmatprep.subr.mxu0 0.0
    %2412 = vmatpush2.msra.mxu0 0.0
    %2413 = vmatprep.mubr.f32.mxu0 0.0
    %2414 = vmatmul.mubr.f32.gmra.mxu0 %v2347
    %v2415 = vpop.f32.mrf.mxu0
    %v2416 = vadd.f32 0.0, %v2415
    %v2417 = vpop.f32.mrf.mxu0
    %2418 = vdwg.mxu0
    %v2420 = vsel %vm1965, %v2051, 0
    %2422 = vmatprep.subr.mxu0 0.0
    %2423 = vmatpush1.msra.mxu0 0.0
    %2424 = vmatprep.subr.mxu0 0.0
    %2425 = vmatpush1.msra.mxu0 0.0
    %2426 = vmatprep.subr.mxu0 0.0
    %2427 = vmatpush1.msra.mxu0 0.0
    %2428 = vmatprep.subr.mxu0 0.0
    %2429 = vmatpush1.msra.mxu0 0.0
    %2430 = vmatprep.subr.mxu0 0.0
    %2431 = vmatpush1.msra.mxu0 0.0
    %2432 = vmatprep.subr.mxu0 0.0
    %2433 = vmatpush1.msra.mxu0 0.0
    %2434 = vmatprep.subr.mxu0 0.0
    %2435 = vmatpush1.msra.mxu0 0.0
    %2436 = vmatprep.subr.mxu0 0.0
    %2437 = vmatpush1.msra.mxu0 0.0
    %2438 = vmatprep.subr.mxu0 0.0
    %2439 = vmatpush1.msra.mxu0 0.0
    %2440 = vmatprep.subr.mxu0 0.0
    %2441 = vmatpush1.msra.mxu0 0.0
    %2442 = vmatprep.subr.mxu0 0.0
    %2443 = vmatpush1.msra.mxu0 0.0
    %2444 = vmatprep.subr.mxu0 0.0
    %2445 = vmatpush1.msra.mxu0 0.0
    %2446 = vmatprep.subr.mxu0 0.0
    %2447 = vmatpush1.msra.mxu0 0.0
    %2448 = vmatprep.subr.mxu0 0.0
    %2449 = vmatpush1.msra.mxu0 0.0
    %2450 = vmatprep.subr.mxu0 0.0
    %2451 = vmatpush1.msra.mxu0 0.0
    %2452 = vmatprep.subr.mxu0 0.0
    %2453 = vmatpush1.msra.mxu0 %v1347
    %2454 = vmatprep.subr.mxu0 0.0
    %2455 = vmatpush2.msra.mxu0 0.0
    %2456 = vmatprep.subr.mxu0 0.0
    %2457 = vmatpush2.msra.mxu0 0.0
    %2458 = vmatprep.subr.mxu0 0.0
    %2459 = vmatpush2.msra.mxu0 0.0
    %2460 = vmatprep.subr.mxu0 0.0
    %2461 = vmatpush2.msra.mxu0 0.0
    %2462 = vmatprep.subr.mxu0 0.0
    %2463 = vmatpush2.msra.mxu0 0.0
    %2464 = vmatprep.subr.mxu0 0.0
    %2465 = vmatpush2.msra.mxu0 0.0
    %2466 = vmatprep.subr.mxu0 0.0
    %2467 = vmatpush2.msra.mxu0 0.0
    %2468 = vmatprep.subr.mxu0 0.0
    %2469 = vmatpush2.msra.mxu0 0.0
    %2470 = vmatprep.subr.mxu0 0.0
    %2471 = vmatpush2.msra.mxu0 0.0
    %2472 = vmatprep.subr.mxu0 0.0
    %2473 = vmatpush2.msra.mxu0 0.0
    %2474 = vmatprep.subr.mxu0 0.0
    %2475 = vmatpush2.msra.mxu0 0.0
    %2476 = vmatprep.subr.mxu0 0.0
    %2477 = vmatpush2.msra.mxu0 0.0
    %2478 = vmatprep.subr.mxu0 0.0
    %2479 = vmatpush2.msra.mxu0 0.0
    %2480 = vmatprep.subr.mxu0 0.0
    %2481 = vmatpush2.msra.mxu0 0.0
    %2482 = vmatprep.subr.mxu0 0.0
    %2483 = vmatpush2.msra.mxu0 0.0
    %2484 = vmatprep.subr.mxu0 0.0
    %2485 = vmatpush2.msra.mxu0 0.0
    %2486 = vmatprep.mubr.f32.mxu0 0.0
    %2487 = vmatmul.mubr.f32.gmra.mxu0 %v2420
    %v2488 = vpop.f32.mrf.mxu0
    %v2489 = vadd.f32 0.0, %v2488
    %v2490 = vpop.f32.mrf.mxu0
    %2491 = vdwg.mxu0
    %v2493 = vsel %vm1965, %v2052, 0
    %2495 = vmatprep.subr.mxu0 0.0
    %2496 = vmatpush1.msra.mxu0 0.0
    %2497 = vmatprep.subr.mxu0 0.0
    %2498 = vmatpush1.msra.mxu0 0.0
    %2499 = vmatprep.subr.mxu0 0.0
    %2500 = vmatpush1.msra.mxu0 0.0
    %2501 = vmatprep.subr.mxu0 0.0
    %2502 = vmatpush1.msra.mxu0 0.0
    %2503 = vmatprep.subr.mxu0 0.0
    %2504 = vmatpush1.msra.mxu0 0.0
    %2505 = vmatprep.subr.mxu0 0.0
    %2506 = vmatpush1.msra.mxu0 0.0
    %2507 = vmatprep.subr.mxu0 0.0
    %2508 = vmatpush1.msra.mxu0 0.0
    %2509 = vmatprep.subr.mxu0 0.0
    %2510 = vmatpush1.msra.mxu0 0.0
    %2511 = vmatprep.subr.mxu0 0.0
    %2512 = vmatpush1.msra.mxu0 0.0
    %2513 = vmatprep.subr.mxu0 0.0
    %2514 = vmatpush1.msra.mxu0 0.0
    %2515 = vmatprep.subr.mxu0 0.0
    %2516 = vmatpush1.msra.mxu0 0.0
    %2517 = vmatprep.subr.mxu0 0.0
    %2518 = vmatpush1.msra.mxu0 0.0
    %2519 = vmatprep.subr.mxu0 0.0
    %2520 = vmatpush1.msra.mxu0 0.0
    %2521 = vmatprep.subr.mxu0 0.0
    %2522 = vmatpush1.msra.mxu0 0.0
    %2523 = vmatprep.subr.mxu0 0.0
    %2524 = vmatpush1.msra.mxu0 0.0
    %2525 = vmatprep.subr.mxu0 0.0
    %2526 = vmatpush1.msra.mxu0 %v1348
    %2527 = vmatprep.subr.mxu0 0.0
    %2528 = vmatpush2.msra.mxu0 0.0
    %2529 = vmatprep.subr.mxu0 0.0
    %2530 = vmatpush2.msra.mxu0 0.0
    %2531 = vmatprep.subr.mxu0 0.0
    %2532 = vmatpush2.msra.mxu0 0.0
    %2533 = vmatprep.subr.mxu0 0.0
    %2534 = vmatpush2.msra.mxu0 0.0
    %2535 = vmatprep.subr.mxu0 0.0
    %2536 = vmatpush2.msra.mxu0 0.0
    %2537 = vmatprep.subr.mxu0 0.0
    %2538 = vmatpush2.msra.mxu0 0.0
    %2539 = vmatprep.subr.mxu0 0.0
    %2540 = vmatpush2.msra.mxu0 0.0
    %2541 = vmatprep.subr.mxu0 0.0
    %2542 = vmatpush2.msra.mxu0 0.0
    %2543 = vmatprep.subr.mxu0 0.0
    %2544 = vmatpush2.msra.mxu0 0.0
    %2545 = vmatprep.subr.mxu0 0.0
    %2546 = vmatpush2.msra.mxu0 0.0
    %2547 = vmatprep.subr.mxu0 0.0
    %2548 = vmatpush2.msra.mxu0 0.0
    %2549 = vmatprep.subr.mxu0 0.0
    %2550 = vmatpush2.msra.mxu0 0.0
    %2551 = vmatprep.subr.mxu0 0.0
    %2552 = vmatpush2.msra.mxu0 0.0
    %2553 = vmatprep.subr.mxu0 0.0
    %2554 = vmatpush2.msra.mxu0 0.0
    %2555 = vmatprep.subr.mxu0 0.0
    %2556 = vmatpush2.msra.mxu0 0.0
    %2557 = vmatprep.subr.mxu0 0.0
    %2558 = vmatpush2.msra.mxu0 0.0
    %2559 = vmatprep.mubr.f32.mxu0 0.0
    %2560 = vmatmul.mubr.f32.gmra.mxu0 %v2493
    %v2561 = vpop.f32.mrf.mxu0
    %v2562 = vadd.f32 0.0, %v2561
    %v2563 = vpop.f32.mrf.mxu0
    %2564 = vdwg.mxu0
    %v2566 = vsel %vm1965, %v2053, 0
    %2568 = vmatprep.subr.mxu0 0.0
    %2569 = vmatpush1.msra.mxu0 0.0
    %2570 = vmatprep.subr.mxu0 0.0
    %2571 = vmatpush1.msra.mxu0 0.0
    %2572 = vmatprep.subr.mxu0 0.0
    %2573 = vmatpush1.msra.mxu0 0.0
    %2574 = vmatprep.subr.mxu0 0.0
    %2575 = vmatpush1.msra.mxu0 0.0
    %2576 = vmatprep.subr.mxu0 0.0
    %2577 = vmatpush1.msra.mxu0 0.0
    %2578 = vmatprep.subr.mxu0 0.0
    %2579 = vmatpush1.msra.mxu0 0.0
    %2580 = vmatprep.subr.mxu0 0.0
    %2581 = vmatpush1.msra.mxu0 0.0
    %2582 = vmatprep.subr.mxu0 0.0
    %2583 = vmatpush1.msra.mxu0 0.0
    %2584 = vmatprep.subr.mxu0 0.0
    %2585 = vmatpush1.msra.mxu0 0.0
    %2586 = vmatprep.subr.mxu0 0.0
    %2587 = vmatpush1.msra.mxu0 0.0
    %2588 = vmatprep.subr.mxu0 0.0
    %2589 = vmatpush1.msra.mxu0 0.0
    %2590 = vmatprep.subr.mxu0 0.0
    %2591 = vmatpush1.msra.mxu0 0.0
    %2592 = vmatprep.subr.mxu0 0.0
    %2593 = vmatpush1.msra.mxu0 0.0
    %2594 = vmatprep.subr.mxu0 0.0
    %2595 = vmatpush1.msra.mxu0 0.0
    %2596 = vmatprep.subr.mxu0 0.0
    %2597 = vmatpush1.msra.mxu0 0.0
    %2598 = vmatprep.subr.mxu0 0.0
    %2599 = vmatpush1.msra.mxu0 %v1349
    %2600 = vmatprep.subr.mxu0 0.0
    %2601 = vmatpush2.msra.mxu0 0.0
    %2602 = vmatprep.subr.mxu0 0.0
    %2603 = vmatpush2.msra.mxu0 0.0
    %2604 = vmatprep.subr.mxu0 0.0
    %2605 = vmatpush2.msra.mxu0 0.0
    %2606 = vmatprep.subr.mxu0 0.0
    %2607 = vmatpush2.msra.mxu0 0.0
    %2608 = vmatprep.subr.mxu0 0.0
    %2609 = vmatpush2.msra.mxu0 0.0
    %2610 = vmatprep.subr.mxu0 0.0
    %2611 = vmatpush2.msra.mxu0 0.0
    %2612 = vmatprep.subr.mxu0 0.0
    %2613 = vmatpush2.msra.mxu0 0.0
    %2614 = vmatprep.subr.mxu0 0.0
    %2615 = vmatpush2.msra.mxu0 0.0
    %2616 = vmatprep.subr.mxu0 0.0
    %2617 = vmatpush2.msra.mxu0 0.0
    %2618 = vmatprep.subr.mxu0 0.0
    %2619 = vmatpush2.msra.mxu0 0.0
    %2620 = vmatprep.subr.mxu0 0.0
    %2621 = vmatpush2.msra.mxu0 0.0
    %2622 = vmatprep.subr.mxu0 0.0
    %2623 = vmatpush2.msra.mxu0 0.0
    %2624 = vmatprep.subr.mxu0 0.0
    %2625 = vmatpush2.msra.mxu0 0.0
    %2626 = vmatprep.subr.mxu0 0.0
    %2627 = vmatpush2.msra.mxu0 0.0
    %2628 = vmatprep.subr.mxu0 0.0
    %2629 = vmatpush2.msra.mxu0 0.0
    %2630 = vmatprep.subr.mxu0 0.0
    %2631 = vmatpush2.msra.mxu0 0.0
    %2632 = vmatprep.mubr.f32.mxu0 0.0
    %2633 = vmatmul.mubr.f32.gmra.mxu0 %v2566
    %v2634 = vpop.f32.mrf.mxu0
    %v2635 = vadd.f32 0.0, %v2634
    %v2636 = vpop.f32.mrf.mxu0
    %2637 = vdwg.mxu0
    %v2638 = vcombine.low %v2124, %v2270
    %v2639 = vcombine.high %v2124, %v2270
    %v2641 = vunpack.c.l.s4 1983009808
    %v2642 = vunpack.c.0.s8 %v2641
    %v2643 = vlaneseq
    %v2644 = vshrl.u32 %v2643, 7
    %v2645 = vsub.s32 %v2642, %v2644
    %v2646 = vrot.slane %v2638, %v2645
    %v2648 = vunpack.c.l.s4 1983009808
    %v2649 = vunpack.c.0.s8 %v2648
    %v2650 = vlaneseq
    %v2651 = vshrl.u32 %v2650, 7
    %v2652 = vsub.s32 %v2649, %v2651
    %v2653 = vrot.slane %v2639, %v2652
    %v2654 = vcombine.low %v2197, %v2343
    %v2655 = vcombine.high %v2197, %v2343
    %v2657 = vunpack.c.l.s4 1983009808
    %v2658 = vunpack.c.0.s8 %v2657
    %v2659 = vlaneseq
    %v2660 = vshrl.u32 %v2659, 7
    %v2661 = vsub.s32 %v2658, %v2660
    %v2662 = vrot.slane %v2654, %v2661
    %v2664 = vunpack.c.l.s4 1983009808
    %v2665 = vunpack.c.0.s8 %v2664
    %v2666 = vlaneseq
    %v2667 = vshrl.u32 %v2666, 7
    %v2668 = vsub.s32 %v2665, %v2667
    %v2669 = vrot.slane %v2655, %v2668
    %v2670 = vcombine.low %v2646, %v2662
    %v2671 = vcombine.high %v2646, %v2662
    %v2673 = vunpack.c.l.s4 1934713408
    %v2674 = vunpack.c.0.s8 %v2673
    %v2675 = vlaneseq
    %v2676 = vshrl.u32 %v2675, 7
    %v2677 = vsub.s32 %v2674, %v2676
    %v2678 = vrot.slane %v2670, %v2677
    %v2680 = vunpack.c.l.s4 1934713408
    %v2681 = vunpack.c.0.s8 %v2680
    %v2682 = vlaneseq
    %v2683 = vshrl.u32 %v2682, 7
    %v2684 = vsub.s32 %v2681, %v2683
    %v2685 = vrot.slane %v2671, %v2684
    %v2686 = vcombine.low %v2653, %v2669
    %v2687 = vcombine.high %v2653, %v2669
    %v2689 = vunpack.c.l.s4 1934713408
    %v2690 = vunpack.c.0.s8 %v2689
    %v2691 = vlaneseq
    %v2692 = vshrl.u32 %v2691, 7
    %v2693 = vsub.s32 %v2690, %v2692
    %v2694 = vrot.slane %v2686, %v2693
    %v2696 = vunpack.c.l.s4 1934713408
    %v2697 = vunpack.c.0.s8 %v2696
    %v2698 = vlaneseq
    %v2699 = vshrl.u32 %v2698, 7
    %v2700 = vsub.s32 %v2697, %v2699
    %v2701 = vrot.slane %v2687, %v2700
    %v2702 = vcombine.high %v2678, 0.0
    %v2703 = vcombine.high %v2685, 0.0
    %v2704 = vcombine.high %v2694, 0.0
    %v2705 = vcombine.high %v2701, 0.0
    %v2706 = vcombine.low %v2416, %v2562
    %v2707 = vcombine.high %v2416, %v2562
    %v2709 = vunpack.c.l.s4 1983009808
    %v2710 = vunpack.c.0.s8 %v2709
    %v2711 = vlaneseq
    %v2712 = vshrl.u32 %v2711, 7
    %v2713 = vsub.s32 %v2710, %v2712
    %v2714 = vrot.slane %v2706, %v2713
    %v2716 = vunpack.c.l.s4 1983009808
    %v2717 = vunpack.c.0.s8 %v2716
    %v2718 = vlaneseq
    %v2719 = vshrl.u32 %v2718, 7
    %v2720 = vsub.s32 %v2717, %v2719
    %v2721 = vrot.slane %v2707, %v2720
    %v2722 = vcombine.low %v2489, %v2635
    %v2723 = vcombine.high %v2489, %v2635
    %v2725 = vunpack.c.l.s4 1983009808
    %v2726 = vunpack.c.0.s8 %v2725
    %v2727 = vlaneseq
    %v2728 = vshrl.u32 %v2727, 7
    %v2729 = vsub.s32 %v2726, %v2728
    %v2730 = vrot.slane %v2722, %v2729
    %v2732 = vunpack.c.l.s4 1983009808
    %v2733 = vunpack.c.0.s8 %v2732
    %v2734 = vlaneseq
    %v2735 = vshrl.u32 %v2734, 7
    %v2736 = vsub.s32 %v2733, %v2735
    %v2737 = vrot.slane %v2723, %v2736
    %v2738 = vcombine.low %v2714, %v2730
    %v2739 = vcombine.high %v2714, %v2730
    %v2741 = vunpack.c.l.s4 1934713408
    %v2742 = vunpack.c.0.s8 %v2741
    %v2743 = vlaneseq
    %v2744 = vshrl.u32 %v2743, 7
    %v2745 = vsub.s32 %v2742, %v2744
    %v2746 = vrot.slane %v2738, %v2745
    %v2748 = vunpack.c.l.s4 1934713408
    %v2749 = vunpack.c.0.s8 %v2748
    %v2750 = vlaneseq
    %v2751 = vshrl.u32 %v2750, 7
    %v2752 = vsub.s32 %v2749, %v2751
    %v2753 = vrot.slane %v2739, %v2752
    %v2754 = vcombine.low %v2721, %v2737
    %v2755 = vcombine.high %v2721, %v2737
    %v2757 = vunpack.c.l.s4 1934713408
    %v2758 = vunpack.c.0.s8 %v2757
    %v2759 = vlaneseq
    %v2760 = vshrl.u32 %v2759, 7
    %v2761 = vsub.s32 %v2758, %v2760
    %v2762 = vrot.slane %v2754, %v2761
    %v2764 = vunpack.c.l.s4 1934713408
    %v2765 = vunpack.c.0.s8 %v2764
    %v2766 = vlaneseq
    %v2767 = vshrl.u32 %v2766, 7
    %v2768 = vsub.s32 %v2765, %v2767
    %v2769 = vrot.slane %v2755, %v2768
    %v2770 = vcombine.high %v2746, 0.0
    %v2771 = vcombine.high %v2753, 0.0
    %v2772 = vcombine.high %v2762, 0.0
    %v2773 = vcombine.high %v2769, 0.0
    %v2774 = vcombine.low %v2678, %v2685
    %v2776 = vunpack.c.l.s4 1983009808
    %v2777 = vunpack.c.0.s8 %v2776
    %v2778 = vlaneseq
    %v2779 = vshrl.u32 %v2778, 7
    %v2780 = vsub.s32 %v2777, %v2779
    %v2781 = vrot.slane %v2774, %v2780
    %v2782 = vcombine.low %v2702, %v2703
    %v2784 = vunpack.c.l.s4 1983009808
    %v2785 = vunpack.c.0.s8 %v2784
    %v2786 = vlaneseq
    %v2787 = vshrl.u32 %v2786, 7
    %v2788 = vsub.s32 %v2785, %v2787
    %v2789 = vrot.slane %v2782, %v2788
    %v2790 = vcombine.low %v2694, %v2701
    %v2792 = vunpack.c.l.s4 1983009808
    %v2793 = vunpack.c.0.s8 %v2792
    %v2794 = vlaneseq
    %v2795 = vshrl.u32 %v2794, 7
    %v2796 = vsub.s32 %v2793, %v2795
    %v2797 = vrot.slane %v2790, %v2796
    %v2798 = vcombine.low %v2704, %v2705
    %v2800 = vunpack.c.l.s4 1983009808
    %v2801 = vunpack.c.0.s8 %v2800
    %v2802 = vlaneseq
    %v2803 = vshrl.u32 %v2802, 7
    %v2804 = vsub.s32 %v2801, %v2803
    %v2805 = vrot.slane %v2798, %v2804
    %v2806 = vcombine.low %v2781, %v2789
    %v2807 = vcombine.high %v2781, %v2789
    %v2809 = vunpack.c.l.s4 1934713408
    %v2810 = vunpack.c.0.s8 %v2809
    %v2811 = vlaneseq
    %v2812 = vshrl.u32 %v2811, 7
    %v2813 = vsub.s32 %v2810, %v2812
    %v2814 = vrot.slane %v2806, %v2813
    %v2816 = vunpack.c.l.s4 1934713408
    %v2817 = vunpack.c.0.s8 %v2816
    %v2818 = vlaneseq
    %v2819 = vshrl.u32 %v2818, 7
    %v2820 = vsub.s32 %v2817, %v2819
    %v2821 = vrot.slane %v2807, %v2820
    %v2822 = vcombine.low %v2797, %v2805
    %v2823 = vcombine.high %v2797, %v2805
    %v2825 = vunpack.c.l.s4 1934713408
    %v2826 = vunpack.c.0.s8 %v2825
    %v2827 = vlaneseq
    %v2828 = vshrl.u32 %v2827, 7
    %v2829 = vsub.s32 %v2826, %v2828
    %v2830 = vrot.slane %v2822, %v2829
    %v2832 = vunpack.c.l.s4 1934713408
    %v2833 = vunpack.c.0.s8 %v2832
    %v2834 = vlaneseq
    %v2835 = vshrl.u32 %v2834, 7
    %v2836 = vsub.s32 %v2833, %v2835
    %v2837 = vrot.slane %v2823, %v2836
    %v2838 = vcombine.low %v2814, %v2830
    %v2839 = vcombine.high %v2814, %v2830
    %v2840 = vcombine.low %v2821, %v2837
    %v2841 = vcombine.high %v2821, %v2837
    %v2842 = vcombine.low %v2746, %v2753
    %v2844 = vunpack.c.l.s4 1983009808
    %v2845 = vunpack.c.0.s8 %v2844
    %v2846 = vlaneseq
    %v2847 = vshrl.u32 %v2846, 7
    %v2848 = vsub.s32 %v2845, %v2847
    %v2849 = vrot.slane %v2842, %v2848
    %v2850 = vcombine.low %v2770, %v2771
    %v2852 = vunpack.c.l.s4 1983009808
    %v2853 = vunpack.c.0.s8 %v2852
    %v2854 = vlaneseq
    %v2855 = vshrl.u32 %v2854, 7
    %v2856 = vsub.s32 %v2853, %v2855
    %v2857 = vrot.slane %v2850, %v2856
    %v2858 = vcombine.low %v2762, %v2769
    %v2860 = vunpack.c.l.s4 1983009808
    %v2861 = vunpack.c.0.s8 %v2860
    %v2862 = vlaneseq
    %v2863 = vshrl.u32 %v2862, 7
    %v2864 = vsub.s32 %v2861, %v2863
    %v2865 = vrot.slane %v2858, %v2864
    %v2866 = vcombine.low %v2772, %v2773
    %v2868 = vunpack.c.l.s4 1983009808
    %v2869 = vunpack.c.0.s8 %v2868
    %v2870 = vlaneseq
    %v2871 = vshrl.u32 %v2870, 7
    %v2872 = vsub.s32 %v2869, %v2871
    %v2873 = vrot.slane %v2866, %v2872
    %v2874 = vcombine.low %v2849, %v2857
    %v2875 = vcombine.high %v2849, %v2857
    %v2877 = vunpack.c.l.s4 1934713408
    %v2878 = vunpack.c.0.s8 %v2877
    %v2879 = vlaneseq
    %v2880 = vshrl.u32 %v2879, 7
    %v2881 = vsub.s32 %v2878, %v2880
    %v2882 = vrot.slane %v2874, %v2881
    %v2884 = vunpack.c.l.s4 1934713408
    %v2885 = vunpack.c.0.s8 %v2884
    %v2886 = vlaneseq
    %v2887 = vshrl.u32 %v2886, 7
    %v2888 = vsub.s32 %v2885, %v2887
    %v2889 = vrot.slane %v2875, %v2888
    %v2890 = vcombine.low %v2865, %v2873
    %v2891 = vcombine.high %v2865, %v2873
    %v2893 = vunpack.c.l.s4 1934713408
    %v2894 = vunpack.c.0.s8 %v2893
    %v2895 = vlaneseq
    %v2896 = vshrl.u32 %v2895, 7
    %v2897 = vsub.s32 %v2894, %v2896
    %v2898 = vrot.slane %v2890, %v2897
    %v2900 = vunpack.c.l.s4 1934713408
    %v2901 = vunpack.c.0.s8 %v2900
    %v2902 = vlaneseq
    %v2903 = vshrl.u32 %v2902, 7
    %v2904 = vsub.s32 %v2901, %v2903
    %v2905 = vrot.slane %v2891, %v2904
    %v2906 = vcombine.low %v2882, %v2898
    %v2907 = vcombine.high %v2882, %v2898
    %v2908 = vcombine.low %v2889, %v2905
    %v2909 = vcombine.high %v2889, %v2905
    %2912 = vrot.lane.b32.xlu0 %v2839, 64
    %v2913 = vpop.permute.xlu0 %2912
    %2914 = vrot.lane.b32.xlu0 %v2907, 64
    %v2915 = vpop.permute.xlu0 %2914
    %2920 = vrot.lane.b32.xlu0 %v2841, 64
    %v2921 = vpop.permute.xlu0 %2920
    %2922 = vrot.lane.b32.xlu0 %v2909, 64
    %v2923 = vpop.permute.xlu0 %2922
    %v2926 = vsel %vm1356, %v2838, %v2913
    %v2927 = vsel %vm1356, %v2906, %v2915
    %v2928 = vsel %vm1356, %v2840, %v2921
    %v2929 = vsel %vm1356, %v2908, %v2923
    %v2930 = vld [vmem:[#allocation7] sm:$0xff]
    %v2931 = vld [vmem:[#allocation7 + $0x8] sm:$0xff]
    %v2932 = vld [vmem:[#allocation7 + $0x10] sm:$0xff]
    %v2933 = vld [vmem:[#allocation7 + $0x18] sm:$0xff]
    %v2934 = vld [vmem:[#allocation7 + $0x20] sm:$0xff]
    %v2935 = vld [vmem:[#allocation7 + $0x28] sm:$0xff]
    %v2936 = vld [vmem:[#allocation7 + $0x30] sm:$0xff]
    %v2937 = vld [vmem:[#allocation7 + $0x38] sm:$0xff]
    %v2938 = vld [vmem:[#allocation7 + $0x40] sm:$0xff]
    %v2939 = vld [vmem:[#allocation7 + $0x48] sm:$0xff]
    %v2940 = vld [vmem:[#allocation7 + $0x50] sm:$0xff]
    %v2941 = vld [vmem:[#allocation7 + $0x58] sm:$0xff]
    %v2942 = vld [vmem:[#allocation7 + $0x60] sm:$0xff]
    %v2943 = vld [vmem:[#allocation7 + $0x68] sm:$0xff]
    %v2944 = vld [vmem:[#allocation7 + $0x70] sm:$0xff]
    %v2945 = vld [vmem:[#allocation7 + $0x78] sm:$0xff]
    %v2946 = vld [vmem:[#allocation7 + $0x80] sm:$0xff]
    %v2947 = vld [vmem:[#allocation7 + $0x88] sm:$0xff]
    %v2948 = vld [vmem:[#allocation7 + $0x90] sm:$0xff]
    %v2949 = vld [vmem:[#allocation7 + $0x98] sm:$0xff]
    %v2950 = vld [vmem:[#allocation7 + $0xa0] sm:$0xff]
    %v2951 = vld [vmem:[#allocation7 + $0xa8] sm:$0xff]
    %v2952 = vld [vmem:[#allocation7 + $0xb0] sm:$0xff]
    %v2953 = vld [vmem:[#allocation7 + $0xb8] sm:$0xff]
    %v2954 = vld [vmem:[#allocation7 + $0xc0] sm:$0xff]
    %v2955 = vld [vmem:[#allocation7 + $0xc8] sm:$0xff]
    %v2956 = vld [vmem:[#allocation7 + $0xd0] sm:$0xff]
    %v2957 = vld [vmem:[#allocation7 + $0xd8] sm:$0xff]
    %v2958 = vld [vmem:[#allocation7 + $0xe0] sm:$0xff]
    %v2959 = vld [vmem:[#allocation7 + $0xe8] sm:$0xff]
    %v2960 = vld [vmem:[#allocation7 + $0xf0] sm:$0xff]
    %v2961 = vld [vmem:[#allocation7 + $0xf8] sm:$0xff]
    %v2962 = vld [vmem:[#allocation7 + $0x100] sm:$0xff]
    %v2963 = vld [vmem:[#allocation7 + $0x108] sm:$0xff]
    %v2964 = vld [vmem:[#allocation7 + $0x110] sm:$0xff]
    %v2965 = vld [vmem:[#allocation7 + $0x118] sm:$0xff]
    %v2966 = vld [vmem:[#allocation7 + $0x120] sm:$0xff]
    %v2967 = vld [vmem:[#allocation7 + $0x128] sm:$0xff]
    %v2968 = vld [vmem:[#allocation7 + $0x130] sm:$0xff]
    %v2969 = vld [vmem:[#allocation7 + $0x138] sm:$0xff]
    %v2970 = vld [vmem:[#allocation7 + $0x140] sm:$0xff]
    %v2971 = vld [vmem:[#allocation7 + $0x148] sm:$0xff]
    %v2972 = vld [vmem:[#allocation7 + $0x150] sm:$0xff]
    %v2973 = vld [vmem:[#allocation7 + $0x158] sm:$0xff]
    %v2974 = vld [vmem:[#allocation7 + $0x160] sm:$0xff]
    %v2975 = vld [vmem:[#allocation7 + $0x168] sm:$0xff]
    %v2976 = vld [vmem:[#allocation7 + $0x170] sm:$0xff]
    %v2977 = vld [vmem:[#allocation7 + $0x178] sm:$0xff]
    %v2978 = vld [vmem:[#allocation7 + $0x180] sm:$0xff]
    %v2979 = vld [vmem:[#allocation7 + $0x188] sm:$0xff]
    %v2980 = vld [vmem:[#allocation7 + $0x190] sm:$0xff]
    %v2981 = vld [vmem:[#allocation7 + $0x198] sm:$0xff]
    %v2982 = vld [vmem:[#allocation7 + $0x1a0] sm:$0xff]
    %v2983 = vld [vmem:[#allocation7 + $0x1a8] sm:$0xff]
    %v2984 = vld [vmem:[#allocation7 + $0x1b0] sm:$0xff]
    %v2985 = vld [vmem:[#allocation7 + $0x1b8] sm:$0xff]
    %v2986 = vld [vmem:[#allocation7 + $0x1c0] sm:$0xff]
    %v2987 = vld [vmem:[#allocation7 + $0x1c8] sm:$0xff]
    %v2988 = vld [vmem:[#allocation7 + $0x1d0] sm:$0xff]
    %v2989 = vld [vmem:[#allocation7 + $0x1d8] sm:$0xff]
    %v2990 = vld [vmem:[#allocation7 + $0x1e0] sm:$0xff]
    %v2991 = vld [vmem:[#allocation7 + $0x1e8] sm:$0xff]
    %v2992 = vld [vmem:[#allocation7 + $0x1f0] sm:$0xff]
    %v2993 = vld [vmem:[#allocation7 + $0x1f8] sm:$0xff]
    %v2994 = vld [vmem:[%s3] sm:$0x3]
    %v2996 = vlaneseq
    %v2997 = vshrl.u32 %v2996, 7
    %v2998 = vsub.s32 0, %v2997
    %v2999 = vrot.slane %v2994, %v2998
    %v3000 = vlaneseq
    %v3001 = vshrl.u32 %v3000, 7
    %v3002 = vsub.s32 1, %v3001
    %v3003 = vrot.slane %v2994, %v3002
    %3006 = vmatprep.subr.mxu0 %v2961
    %3007 = vmatpush1.msra.mxu0 %v2960
    %3008 = vmatprep.subr.mxu0 %v2959
    %3009 = vmatpush1.msra.mxu0 %v2958
    %3010 = vmatprep.subr.mxu0 %v2957
    %3011 = vmatpush1.msra.mxu0 %v2956
    %3012 = vmatprep.subr.mxu0 %v2955
    %3013 = vmatpush1.msra.mxu0 %v2954
    %3014 = vmatprep.subr.mxu0 %v2953
    %3015 = vmatpush1.msra.mxu0 %v2952
    %3016 = vmatprep.subr.mxu0 %v2951
    %3017 = vmatpush1.msra.mxu0 %v2950
    %3018 = vmatprep.subr.mxu0 %v2949
    %3019 = vmatpush1.msra.mxu0 %v2948
    %3020 = vmatprep.subr.mxu0 %v2947
    %3021 = vmatpush1.msra.mxu0 %v2946
    %3022 = vmatprep.subr.mxu0 %v2945
    %3023 = vmatpush1.msra.mxu0 %v2944
    %3024 = vmatprep.subr.mxu0 %v2943
    %3025 = vmatpush1.msra.mxu0 %v2942
    %3026 = vmatprep.subr.mxu0 %v2941
    %3027 = vmatpush1.msra.mxu0 %v2940
    %3028 = vmatprep.subr.mxu0 %v2939
    %3029 = vmatpush1.msra.mxu0 %v2938
    %3030 = vmatprep.subr.mxu0 %v2937
    %3031 = vmatpush1.msra.mxu0 %v2936
    %3032 = vmatprep.subr.mxu0 %v2935
    %3033 = vmatpush1.msra.mxu0 %v2934
    %3034 = vmatprep.subr.mxu0 %v2933
    %3035 = vmatpush1.msra.mxu0 %v2932
    %3036 = vmatprep.subr.mxu0 %v2931
    %3037 = vmatpush1.msra.mxu0 %v2930
    %3038 = vmatprep.subr.mxu0 %v2993
    %3039 = vmatpush2.msra.mxu0 %v2992
    %3040 = vmatprep.subr.mxu0 %v2991
    %3041 = vmatpush2.msra.mxu0 %v2990
    %3042 = vmatprep.subr.mxu0 %v2989
    %3043 = vmatpush2.msra.mxu0 %v2988
    %3044 = vmatprep.subr.mxu0 %v2987
    %3045 = vmatpush2.msra.mxu0 %v2986
    %3046 = vmatprep.subr.mxu0 %v2985
    %3047 = vmatpush2.msra.mxu0 %v2984
    %3048 = vmatprep.subr.mxu0 %v2983
    %3049 = vmatpush2.msra.mxu0 %v2982
    %3050 = vmatprep.subr.mxu0 %v2981
    %3051 = vmatpush2.msra.mxu0 %v2980
    %3052 = vmatprep.subr.mxu0 %v2979
    %3053 = vmatpush2.msra.mxu0 %v2978
    %3054 = vmatprep.subr.mxu0 %v2977
    %3055 = vmatpush2.msra.mxu0 %v2976
    %3056 = vmatprep.subr.mxu0 %v2975
    %3057 = vmatpush2.msra.mxu0 %v2974
    %3058 = vmatprep.subr.mxu0 %v2973
    %3059 = vmatpush2.msra.mxu0 %v2972
    %3060 = vmatprep.subr.mxu0 %v2971
    %3061 = vmatpush2.msra.mxu0 %v2970
    %3062 = vmatprep.subr.mxu0 %v2969
    %3063 = vmatpush2.msra.mxu0 %v2968
    %3064 = vmatprep.subr.mxu0 %v2967
    %3065 = vmatpush2.msra.mxu0 %v2966
    %3066 = vmatprep.subr.mxu0 %v2965
    %3067 = vmatpush2.msra.mxu0 %v2964
    %3068 = vmatprep.subr.mxu0 %v2963
    %3069 = vmatpush2.msra.mxu0 %v2962
    %3070 = vmatprep.mubr.f32.mxu0 %v2928
    %3071 = vmatmul.mubr.f32.gmra.mxu0 %v2926
    %v3072 = vpop.f32.mrf.mxu0
    %v3073 = vadd.f32 %v2999, %v3072
    %v3074 = vpop.f32.mrf.mxu0
    %v3075 = vadd.f32 %v3003, %v3074
    %3076 = vmatprep.mubr.f32.mxu0 %v2929
    %3077 = vmatmul.mubr.f32.gmra.mxu0 %v2927
    %v3078 = vpop.f32.mrf.mxu0
    %v3079 = vadd.f32 %v2999, %v3078
    %v3080 = vpop.f32.mrf.mxu0
    %v3081 = vadd.f32 %v3003, %v3080
    %3082 = vdwg.mxu0
    %3083 = vst [vmem:[#allocation8] sm:$0xff] %v3073
    %3084 = vst [vmem:[#allocation8 + $0x8] sm:$0xff] %v3075
    %3085 = vst [vmem:[#allocation8 + $0x10] sm:$0xff] %v3079
    %3086 = vst [vmem:[#allocation8 + $0x18] sm:$0xff] %v3081
    // Predicated region
    $region30: #{tpu_custom_call.1} parent=1 // pred_check
      _
    $region31: #{tpu_custom_call.1} parent=1 // pred_check_branch
      %3088 = sbr.rel (0) target = $region33
    $region32: #{tpu_custom_call.1} parent=1 // pred_region
      %s3090 = ssub.s32 512, 512
      %3091 = vsyncadd [#allocation4], %s3090
      %s3092 = sshll.u32 [#allocation8], 4
      %s3093 = int_to_ptr.vmem [resolvable:$true] %s3092
      %3098 = dma.vmem_to_hbm [thread:$0]  %s3093, 512, %s4, [#allocation4], 256, 256, 16
    $region33: #{tpu_custom_call.1} parent=1 // pred_fallthru
      _
    // Predicated region
    $region34: #{tpu_custom_call.1} parent=1 // pred_check
      _
    $region35: #{tpu_custom_call.1} parent=1 // pred_check_branch
      %3100 = sbr.rel (0) target = $region37
    $region36: #{tpu_custom_call.1} parent=1 // pred_region
      %3101 = dma.done [#allocation4], 512
    $region37: #{tpu_custom_call.1} parent=1 // pred_fallthru
      _
    %3102 = vsyncpa [#allocation3], 1
    %3103 = vsyncpa [#allocation6], 1
    %3104 = vsyncpa [#allocation4], 1

</llo_original>
